<compile_context>
chip_gen: v5e
topology: v5e:2x2
jax: 0.10.0
libtpu: 0.0.40
codegen_flags: <defaults>
</compile_context>

<pallas_src>
import functools

import numpy as np
import jax
import jax.numpy as jnp
from jax.experimental import pallas as pl
from jax.experimental.pallas import tpu as pltpu

# ----------------------- synthetic "GP" configuration -----------------------
N = 16                       # number of waveguides
RES = 16                     # period resolution
TOTAL = N * RES              # 256 = total field size
KNN = 2                      # nearest-neighbour reach of a mode profile
W_EY = (2 * KNN + 1) * RES   # 80 = samples of one mode profile
LP = (N + 2 * KNN) * RES     # 320 = padded field size
HID = 32                     # hidden width of the small MLPs
MODES = 1
LAMS = (0.633, 0.532)        # two wavelengths -> two Metalayer_sub / freespace_layer pairs
H_MIN, H_MAX = 0.12, 0.30
WH = 0.75                    # waveguide height
DX = 0.03
PROP_DIS = 10.0
N0 = 1.0
N_SUB = 1.46
C_EPSILON = 1.0
AMP_SCALE = C_EPSILON * DX * N_SUB / N0

# Lane layout of the in-vreg overlap-add accumulator: padded index 0 sits at lane EN_BASE
# so the central N*RES window starts at lane 128 (vreg aligned) and the final (2, 256)
# LHS fed to the MXU is a full, lane-aligned slice.
EN_W = 512
EN_LO = 128
EN_BASE = EN_LO - KNN * RES          # 96
assert EN_BASE + (N - 1) * RES + W_EY <= EN_W


def _overlap_add_fold(w):
    """gen_En overlap-add, entirely in vregs.

    w: (N, W_EY); returns (1, EN_W) row with sum_i w[i] placed at lane EN_BASE + i*RES.
    log2(N) stages of  x <- x[:half] + zero_fill_lane_shift(x[half:], half*RES).
    Shifts are plain concat+slice (no misaligned VMEM RMWs, no strided stores).
    """
    x = jnp.concatenate(
        [jnp.zeros((N, EN_BASE), w.dtype), w,
         jnp.zeros((N, EN_W - EN_BASE - W_EY), w.dtype)], axis=1)          # (N, EN_W)
    rows = N
    while rows > 1:
        half = rows // 2
        sh = half * RES
        top = x[:half]
        bot = x[half:rows]
        bot = jnp.concatenate(
            [jnp.zeros((half, sh), w.dtype), bot[:, :EN_W - sh]], axis=1)  # shift right
        x = top + bot
        rows = half
    return x                                                               # (1, EN_W)


# ------------------------------- fused Pallas kernel ------------------------------
def _scmt_fused_kernel(hp_ref, e0wr_ref, e0wi_ref, kwh_ref,
                       w1_ref, b1_ref, w2_ref, b2_ref, w3_ref, b3_ref,
                       gt_ref, ef_ref,
                       *, h_min, h_max, amp_scale):
    f32 = jnp.float32

    # Metalayer: hs = sigmoid(h_paras)*(h_max-h_min)+h_min        (EUP)
    hs = jax.nn.sigmoid(hp_ref[...]) * (h_max - h_min) + h_min              # (N, 1)

    # gen_neff MLP + mode-profile (Ey) MLP fused via block-diagonal weights:
    # columns [0:HID] carry the neff branch, columns [HID:2*HID] the Ey branch.
    hg1 = jnp.tanh(hs * w1_ref[...] + b1_ref[...])                          # (N, 2*HID)
    hg2 = jnp.tanh(jnp.dot(hg1, w2_ref[...], preferred_element_type=f32)
                   + b2_ref[...])                                           # (N, 2*HID)
    out3 = jnp.dot(hg2, w3_ref[...], preferred_element_type=f32) + b3_ref[...]  # (N, W_EY+1)
    eys = out3[:, :W_EY]                                                    # (N, W_EY)
    neff = 1.0 + jax.nn.sigmoid(out3[:, W_EY:W_EY + MODES])                 # (N, 1), in [1, 2]

    # overlap integral U0_i = <Ey_i, E0|window_i>   (VPU multiply + lane reduce)
    u0r = jnp.sum(eys * e0wr_ref[...], axis=1, keepdims=True)               # (N, 1)
    u0i = jnp.sum(eys * e0wi_ref[...], axis=1, keepdims=True)               # (N, 1)

    # COUPLING == False: Uz = exp(1j*neff*k*wh) * U0; gen_En amplitude folded in.
    # TODO(synk): verify the extra *neff amplitude factor against the original gen_En
    #             (C_EPSILON*dx*n_sub/n0 constant vs. neff-dependent transmission).
    phase = neff * kwh_ref[...]
    cph = jnp.cos(phase)
    sph = jnp.sin(phase)
    amp = amp_scale * neff
    uzr = amp * (cph * u0r - sph * u0i)                                     # (N, 1)
    uzi = amp * (sph * u0r + cph * u0i)                                     # (N, 1)

    # gen_En overlap-add of Uz_i * Ey_i, kept in vregs (no VMEM scratch, no RMW loop)
    en_r = _overlap_add_fold(uzr * eys)                                     # (1, EN_W)
    en_i = _overlap_add_fold(uzi * eys)                                     # (1, EN_W)
    en = jnp.concatenate([en_r, en_i], axis=0)                              # (2, EN_W)
    en_c = en[:, EN_LO:EN_LO + TOTAL].astype(jnp.bfloat16)                  # (2, TOTAL)

    # freespace_layer: Ef = G @ En  ->  one MXU dot against [Gr^T | Gi^T] (bf16, f32 acc)
    pq = jnp.dot(en_c, gt_ref[...], preferred_element_type=f32)             # (2, 2*TOTAL)
    efr = pq[0:1, :TOTAL] - pq[1:2, TOTAL:]
    efi = pq[1:2, :TOTAL] + pq[0:1, TOTAL:]
    ef_ref[...] = jnp.concatenate([efr, efi], axis=0)                       # single (2,256) store


# ------------------------------------ forward --------------------------------------
def _make_forward(core_parallel: bool):
    kernel = functools.partial(_scmt_fused_kernel,
                               h_min=H_MIN, h_max=H_MAX, amp_scale=AMP_SCALE)

    def perlam(d1, d2):       # per-wavelength stacked operand; leading lambda dim squeezed
        return pl.BlockSpec((None, d1, d2), lambda l: (l, 0, 0))

    def shared(d1, d2):       # wavelength-independent operand (DMA'd once)
        return pl.BlockSpec((d1, d2), lambda l: (0, 0))

    if core_parallel and hasattr(pltpu, "CORE_PARALLEL"):
        sem = (pltpu.CORE_PARALLEL,)       # v7x: one lambda per TensorCore
    else:
        sem = ("arbitrary",)               # single-TC chips: two pipelined steps

    @jax.jit
    def fwd(hp, e0wr, e0wi, kwh, w1c, b1c, w2bd, b2c, w3bd, b3c, gt):
        L = kwh.shape[0]
        ef = pl.pallas_call(
            kernel,
            grid=(L,),
            in_specs=[
                shared(N, 1),                                  # h_paras
                shared(N, W_EY), shared(N, W_EY),              # E0 windows (re, im)
                perlam(1, 1),                                  # k * wh
                perlam(1, 2 * HID), perlam(1, 2 * HID),        # fused layer-1 w, b
                perlam(2 * HID, 2 * HID), perlam(1, 2 * HID),  # block-diag layer-2 w, b
                perlam(2 * HID, W_EY + MODES),                 # block-diag layer-3 w
                perlam(1, W_EY + MODES),                       # layer-3 b
                perlam(TOTAL, 2 * TOTAL),                      # [Gr^T | Gi^T] bf16
            ],
            out_specs=pl.BlockSpec((None, 2, TOTAL), lambda l: (l, 0, 0)),
            out_shape=jax.ShapeDtypeStruct((L, 2, TOTAL), jnp.float32),
            compiler_params=pltpu.CompilerParams(dimension_semantics=sem),
        )(hp, e0wr, e0wi, kwh, w1c, b1c, w2bd, b2c, w3bd, b3c, gt)
        return (ef[:, 0, :] + 1j * ef[:, 1, :]).astype(jnp.complex64)       # (L, TOTAL)

    return fwd


# --------------------------- setup-time input construction ---------------------------
def _e0_windows(E0):
    """Windowed view of the padded input field: E0win[i, j] = E0_pad[i*res + j]."""
    E0_pad = jnp.pad(E0, (KNN * RES, KNN * RES))
    idx = np.arange(N)[:, None] * RES + np.arange(W_EY)[None, :]
    E0win = E0_pad[idx]
    return (jnp.real(E0win).astype(jnp.float32),
            jnp.imag(E0win).astype(jnp.float32))


def init_mlp3(key, in_dim, hid, out_dim, scale=0.5):
    k1, k2, k3 = jax.random.split(key, 3)
    w1 = jax.random.normal(k1, (in_dim, hid), jnp.float32) * scale
    b1 = jnp.zeros((1, hid), jnp.float32)
    w2 = jax.random.normal(k2, (hid, hid), jnp.float32) * (scale / np.sqrt(hid))
    b2 = jnp.zeros((1, hid), jnp.float32)
    w3 = jax.random.normal(k3, (hid, out_dim), jnp.float32) * (scale / np.sqrt(hid))
    b3 = jnp.zeros((1, out_dim), jnp.float32)
    return (w1, b1, w2, b2, w3, b3)


def _pack_lambda_params(meta_params):
    """Stack per-lambda weights; fuse neff-net / Ey-net into block-diagonal layers."""
    w1c, b1c, w2bd, b2c, w3bd, b3c = [], [], [], [], [], []
    for mp in meta_params:
        nw1, nb1, nw2, nb2, nw3, nb3 = mp["neff"]
        ew1, eb1, ew2, eb2, ew3, eb3 = mp["ey"]
        w1c.append(jnp.concatenate([nw1, ew1], axis=1))                    # (1, 2H)
        b1c.append(jnp.concatenate([nb1, eb1], axis=1))
        z = jnp.zeros((HID, HID), jnp.float32)
        w2bd.append(jnp.concatenate(
            [jnp.concatenate([nw2, z], axis=1),
             jnp.concatenate([z, ew2], axis=1)], axis=0))                  # (2H, 2H)
        b2c.append(jnp.concatenate([nb2, eb2], axis=1))
        w3bd.append(jnp.concatenate(
            [jnp.concatenate([jnp.zeros((HID, W_EY), jnp.float32), nw3], axis=1),
             jnp.concatenate([ew3, jnp.zeros((HID, MODES), jnp.float32)], axis=1)],
            axis=0))                                                        # (2H, W_EY+1)
        b3c.append(jnp.concatenate([eb3, nb3], axis=1))
    stk = lambda xs: jnp.stack(xs, axis=0)
    return stk(w1c), stk(b1c), stk(w2bd), stk(b2c), stk(w3bd), stk(b3c)


def build_freespace_G(lam):
    # Deterministic synthetic 1-D free-space propagation matrix (Rayleigh-Sommerfeld-like).
    x = (np.arange(TOTAL) - (TOTAL - 1) / 2.0) * DX
    dmn = x[:, None] - x[None, :]
    r = np.sqrt(PROP_DIS ** 2 + dmn ** 2)
    k0 = 2.0 * np.pi / lam
    G = DX * (PROP_DIS / r) * np.exp(1j * k0 * r) / np.sqrt(lam * r)
    return np.asarray(G, np.complex64)


def _pack_freespace(lams):
    gts, Gs = [], []
    for lam in lams:
        G = build_freespace_G(lam)
        Gs.append(jnp.asarray(G))
        GT = G.T
        gts.append(np.concatenate([np.real(GT), np.imag(GT)], axis=1))      # (256, 512)
    gt = jnp.asarray(np.stack(gts, axis=0)).astype(jnp.bfloat16)            # (L, 256, 512)
    return gt, Gs


# --------------------------- pure-JAX reference (correctness check) ---------------------------
def reference_forward(E0, h_paras, meta_params, Gs, lams):
    with jax.default_matmul_precision("highest"):
        hs = jax.nn.sigmoid(h_paras) * (H_MAX - H_MIN) + H_MIN
        x = hs.reshape(N, 1)
        e0wr, e0wi = _e0_windows(E0)
        E0win = (e0wr + 1j * e0wi).astype(jnp.complex64)
        outs = []
        for li, lam in enumerate(lams):
            nw1, nb1, nw2, nb2, nw3, nb3 = meta_params[li]["neff"]
            ew1, eb1, ew2, eb2, ew3, eb3 = meta_params[li]["ey"]
            h1 = jnp.tanh(jnp.dot(x, nw1) + nb1)
            h2 = jnp.tanh(jnp.dot(h1, nw2) + nb2)
            neff = 1.0 + jax.nn.sigmoid(jnp.dot(h2, nw3) + nb3)             # (N, 1)
            g1 = jnp.tanh(jnp.dot(x, ew1) + eb1)
            g2 = jnp.tanh(jnp.dot(g1, ew2) + eb2)
            eys = jnp.dot(g2, ew3) + eb3                                    # (N, W_EY)
            u0 = jnp.sum(eys.astype(jnp.complex64) * E0win, axis=1)         # (N,)
            k0 = 2.0 * np.pi / lam
            uz = jnp.exp(1j * neff[:, 0] * k0 * WH) * u0
            amp = AMP_SCALE * neff[:, 0]
            w = (amp * uz)[:, None] * eys.astype(jnp.complex64)             # (N, W_EY)
            en_pad = jnp.zeros((LP,), jnp.complex64)
            for i in range(N):
                en_pad = en_pad.at[i * RES:i * RES + W_EY].add(w[i])
            en = en_pad[KNN * RES:KNN * RES + TOTAL]
            outs.append(jnp.dot(Gs[li], en))
        return jnp.stack(outs, axis=0)


# ----------------------------------- main --------------------------------------
if __name__ == "__main__":
    key = jax.random.PRNGKey(0)
    k_h, k_e0r, k_e0i, k_p = jax.random.split(key, 4)

    # Metalayer parameter h_paras (PyTorch reset() sets them to 0; use small random values)
    h_paras = jax.random.normal(k_h, (N,), jnp.float32) * 0.5

    # input field E0: (N * res,) complex
    E0 = (0.1 * (jax.random.normal(k_e0r, (TOTAL,), jnp.float32)
                 + 1j * jax.random.normal(k_e0i, (TOTAL,), jnp.float32))).astype(jnp.complex64)

    # per-wavelength synthetic sub-network weights (gen_neff / mode-profile nets)
    meta_params = []
    for li in range(len(LAMS)):
        kk = jax.random.fold_in(k_p, li)
        kn, ke = jax.random.split(kk)
        meta_params.append({"neff": init_mlp3(kn, 1, HID, MODES),
                            "ey": init_mlp3(ke, 1, HID, W_EY)})

    L = len(LAMS)
    w1c, b1c, w2bd, b2c, w3bd, b3c = _pack_lambda_params(meta_params)
    gt, Gs = _pack_freespace(LAMS)
    kwh = jnp.asarray([2.0 * np.pi / lam * WH for lam in LAMS],
                      jnp.float32).reshape(L, 1, 1)
    hp = h_paras.reshape(N, 1).astype(jnp.float32)
    e0wr, e0wi = _e0_windows(E0)

    Ef_ref = jax.block_until_ready(reference_forward(E0, h_paras, meta_params, Gs, LAMS))

    args = (hp, e0wr, e0wi, kwh, w1c, b1c, w2bd, b2c, w3bd, b3c, gt)

    def run(core_parallel):
        fwd = _make_forward(core_parallel)
        ef = jax.block_until_ready(fwd(*args))
        err = float(jnp.max(jnp.abs(ef - Ef_ref)))
        scale = float(jnp.max(jnp.abs(Ef_ref)))
        assert err <= 5e-2 * scale + 1e-5, (err, scale)
        return ef

    try:
        Ef = run(core_parallel=True)      # v7x: one lambda per TensorCore
    except Exception:
        Ef = run(core_parallel=False)     # single-TC chips / older API: plain 2-step grid

    Efs = [Ef[i] for i in range(L)]
    assert len(Efs) == len(LAMS)
    for ef in Efs:
        assert ef.shape == (TOTAL,) and ef.dtype == jnp.complex64
        assert bool(jnp.all(jnp.isfinite(jnp.abs(ef))))
    print("KERNEL_OK")
</pallas_src>

<mosaic_0001>
module attributes {stable_mosaic.version = 11 : i64} {
  func.func @_scmt_fused_kernel(%arg0: i32, %arg1: memref<16x1xf32, #tpu.memory_space<vmem>>, %arg2: memref<16x80xf32, #tpu.memory_space<vmem>>, %arg3: memref<16x80xf32, #tpu.memory_space<vmem>>, %arg4: memref<1x1x1xf32, #tpu.memory_space<vmem>>, %arg5: memref<1x1x64xf32, #tpu.memory_space<vmem>>, %arg6: memref<1x1x64xf32, #tpu.memory_space<vmem>>, %arg7: memref<1x64x64xf32, #tpu.memory_space<vmem>>, %arg8: memref<1x1x64xf32, #tpu.memory_space<vmem>>, %arg9: memref<1x64x81xf32, #tpu.memory_space<vmem>>, %arg10: memref<1x1x81xf32, #tpu.memory_space<vmem>>, %arg11: memref<1x256x512xbf16, #tpu.memory_space<vmem>>, %arg12: memref<1x2x256xf32, #tpu.memory_space<vmem>>) attributes {dimension_semantics = [#tpu.dimension_semantics<core_parallel>], iteration_bounds = array<i64: 2>, scalar_prefetch = 0 : i64, scratch_operands = 0 : i64, tpu.core_type = #tpu.core_type<tc>, window_params = [{pipeline_mode = #tpu.pipeline_mode<synchronous>, transform_indices = @transform_0, window_bounds = array<i64: 16, 1>}, {pipeline_mode = #tpu.pipeline_mode<synchronous>, transform_indices = @transform_1, window_bounds = array<i64: 16, 80>}, {pipeline_mode = #tpu.pipeline_mode<synchronous>, transform_indices = @transform_2, window_bounds = array<i64: 16, 80>}, {transform_indices = @transform_3, window_bounds = array<i64: 1, 1, 1>}, {transform_indices = @transform_4, window_bounds = array<i64: 1, 1, 64>}, {transform_indices = @transform_5, window_bounds = array<i64: 1, 1, 64>}, {transform_indices = @transform_6, window_bounds = array<i64: 1, 64, 64>}, {transform_indices = @transform_7, window_bounds = array<i64: 1, 1, 64>}, {transform_indices = @transform_8, window_bounds = array<i64: 1, 64, 81>}, {transform_indices = @transform_9, window_bounds = array<i64: 1, 1, 81>}, {transform_indices = @transform_10, window_bounds = array<i64: 1, 256, 512>}, {transform_indices = @transform_11, window_bounds = array<i64: 1, 2, 256>}]} {
    %c0 = arith.constant 0 : index
    %c0_0 = arith.constant 0 : index
    %0 = vector.load %arg1[%c0, %c0_0] : memref<16x1xf32, #tpu.memory_space<vmem>>, vector<16x1xf32>
    %1 = arith.negf %0 : vector<16x1xf32>
    %2 = math.exp %1 : vector<16x1xf32>
    %cst = arith.constant 1.000000e+00 : f32
    %3 = vector.broadcast %cst : f32 to vector<16x1xf32>
    %4 = arith.addf %3, %2 : vector<16x1xf32>
    %5 = arith.divf %3, %4 : vector<16x1xf32>
    %cst_1 = arith.constant 1.800000e-01 : f32
    %6 = vector.broadcast %cst_1 : f32 to vector<16x1xf32>
    %7 = arith.mulf %5, %6 : vector<16x1xf32>
    %cst_2 = arith.constant 1.200000e-01 : f32
    %8 = vector.broadcast %cst_2 : f32 to vector<16x1xf32>
    %9 = arith.addf %7, %8 : vector<16x1xf32>
    %c0_3 = arith.constant 0 : index
    %c0_4 = arith.constant 0 : index
    %c0_5 = arith.constant 0 : index
    %10 = vector.load %arg5[%c0_3, %c0_4, %c0_5] : memref<1x1x64xf32, #tpu.memory_space<vmem>>, vector<1x1x64xf32>
    %11 = vector.shape_cast %10 : vector<1x1x64xf32> to vector<1x64xf32>
    %12 = vector.broadcast %9 : vector<16x1xf32> to vector<16x64xf32>
    %13 = vector.broadcast %11 : vector<1x64xf32> to vector<16x64xf32>
    %14 = arith.mulf %12, %13 : vector<16x64xf32>
    %c0_6 = arith.constant 0 : index
    %c0_7 = arith.constant 0 : index
    %c0_8 = arith.constant 0 : index
    %15 = vector.load %arg6[%c0_6, %c0_7, %c0_8] : memref<1x1x64xf32, #tpu.memory_space<vmem>>, vector<1x1x64xf32>
    %16 = vector.shape_cast %15 : vector<1x1x64xf32> to vector<1x64xf32>
    %17 = vector.broadcast %16 : vector<1x64xf32> to vector<16x64xf32>
    %18 = arith.addf %14, %17 : vector<16x64xf32>
    %19 = math.tanh %18 : vector<16x64xf32>
    %c0_9 = arith.constant 0 : index
    %c0_10 = arith.constant 0 : index
    %c0_11 = arith.constant 0 : index
    %20 = vector.load %arg7[%c0_9, %c0_10, %c0_11] : memref<1x64x64xf32, #tpu.memory_space<vmem>>, vector<1x64x64xf32>
    %21 = vector.shape_cast %20 : vector<1x64x64xf32> to vector<64x64xf32>
    %cst_12 = arith.constant dense<0.000000e+00> : vector<16x64xf32>
    %22 = tpu.matmul %19, %21, %cst_12 {dimension_numbers = #tpu.dot_dimension_numbers<[1], [0], [0], [1], [0, 0, 1, 1], [], []>} : vector<16x64xf32>, vector<64x64xf32>, vector<16x64xf32> -> vector<16x64xf32>
    %c0_13 = arith.constant 0 : index
    %c0_14 = arith.constant 0 : index
    %c0_15 = arith.constant 0 : index
    %23 = vector.load %arg8[%c0_13, %c0_14, %c0_15] : memref<1x1x64xf32, #tpu.memory_space<vmem>>, vector<1x1x64xf32>
    %24 = vector.shape_cast %23 : vector<1x1x64xf32> to vector<1x64xf32>
    %25 = vector.broadcast %24 : vector<1x64xf32> to vector<16x64xf32>
    %26 = arith.addf %22, %25 : vector<16x64xf32>
    %27 = math.tanh %26 : vector<16x64xf32>
    %c0_16 = arith.constant 0 : index
    %c0_17 = arith.constant 0 : index
    %c0_18 = arith.constant 0 : index
    %28 = vector.load %arg9[%c0_16, %c0_17, %c0_18] : memref<1x64x81xf32, #tpu.memory_space<vmem>>, vector<1x64x81xf32>
    %29 = vector.shape_cast %28 : vector<1x64x81xf32> to vector<64x81xf32>
    %cst_19 = arith.constant dense<0.000000e+00> : vector<16x81xf32>
    %30 = tpu.matmul %27, %29, %cst_19 {dimension_numbers = #tpu.dot_dimension_numbers<[1], [0], [0], [1], [0, 0, 1, 1], [], []>} : vector<16x64xf32>, vector<64x81xf32>, vector<16x81xf32> -> vector<16x81xf32>
    %c0_20 = arith.constant 0 : index
    %c0_21 = arith.constant 0 : index
    %c0_22 = arith.constant 0 : index
    %31 = vector.load %arg10[%c0_20, %c0_21, %c0_22] : memref<1x1x81xf32, #tpu.memory_space<vmem>>, vector<1x1x81xf32>
    %32 = vector.shape_cast %31 : vector<1x1x81xf32> to vector<1x81xf32>
    %33 = vector.broadcast %32 : vector<1x81xf32> to vector<16x81xf32>
    %34 = arith.addf %30, %33 : vector<16x81xf32>
    %35 = vector.extract_strided_slice %34 {offsets = [0, 0], sizes = [16, 80], strides = [1, 1]} : vector<16x81xf32> to vector<16x80xf32>
    %36 = vector.extract_strided_slice %34 {offsets = [0, 80], sizes = [16, 1], strides = [1, 1]} : vector<16x81xf32> to vector<16x1xf32>
    %37 = arith.negf %36 : vector<16x1xf32>
    %38 = math.exp %37 : vector<16x1xf32>
    %cst_23 = arith.constant 1.000000e+00 : f32
    %39 = vector.broadcast %cst_23 : f32 to vector<16x1xf32>
    %40 = arith.addf %39, %38 : vector<16x1xf32>
    %41 = arith.divf %39, %40 : vector<16x1xf32>
    %cst_24 = arith.constant 1.000000e+00 : f32
    %42 = vector.broadcast %cst_24 : f32 to vector<16x1xf32>
    %43 = arith.addf %42, %41 : vector<16x1xf32>
    %c0_25 = arith.constant 0 : index
    %c0_26 = arith.constant 0 : index
    %44 = vector.load %arg2[%c0_25, %c0_26] : memref<16x80xf32, #tpu.memory_space<vmem>>, vector<16x80xf32>
    %45 = arith.mulf %35, %44 : vector<16x80xf32>
    %cst_27 = arith.constant dense<0.000000e+00> : vector<16xf32>
    %46 = vector.multi_reduction <add>, %45, %cst_27 [1] : vector<16x80xf32> to vector<16xf32>
    %47 = vector.shape_cast %46 : vector<16xf32> to vector<16x1xf32>
    %c0_28 = arith.constant 0 : index
    %c0_29 = arith.constant 0 : index
    %48 = vector.load %arg3[%c0_28, %c0_29] : memref<16x80xf32, #tpu.memory_space<vmem>>, vector<16x80xf32>
    %49 = arith.mulf %35, %48 : vector<16x80xf32>
    %cst_30 = arith.constant dense<0.000000e+00> : vector<16xf32>
    %50 = vector.multi_reduction <add>, %49, %cst_30 [1] : vector<16x80xf32> to vector<16xf32>
    %51 = vector.shape_cast %50 : vector<16xf32> to vector<16x1xf32>
    %c0_31 = arith.constant 0 : index
    %c0_32 = arith.constant 0 : index
    %c0_33 = arith.constant 0 : index
    %52 = vector.load %arg4[%c0_31, %c0_32, %c0_33] : memref<1x1x1xf32, #tpu.memory_space<vmem>>, vector<1x1x1xf32>
    %53 = vector.shape_cast %52 : vector<1x1x1xf32> to vector<1x1xf32>
    %54 = vector.broadcast %53 : vector<1x1xf32> to vector<16x1xf32>
    %55 = arith.mulf %43, %54 : vector<16x1xf32>
    %56 = math.cos %55 : vector<16x1xf32>
    %57 = math.sin %55 : vector<16x1xf32>
    %cst_34 = arith.constant 4.380000e-02 : f32
    %58 = vector.broadcast %cst_34 : f32 to vector<16x1xf32>
    %59 = arith.mulf %58, %43 : vector<16x1xf32>
    %60 = arith.mulf %56, %47 : vector<16x1xf32>
    %61 = arith.mulf %57, %51 : vector<16x1xf32>
    %62 = arith.subf %60, %61 : vector<16x1xf32>
    %63 = arith.mulf %59, %62 : vector<16x1xf32>
    %64 = arith.mulf %57, %47 : vector<16x1xf32>
    %65 = arith.mulf %56, %51 : vector<16x1xf32>
    %66 = arith.addf %64, %65 : vector<16x1xf32>
    %67 = arith.mulf %59, %66 : vector<16x1xf32>
    %68 = vector.broadcast %63 : vector<16x1xf32> to vector<16x80xf32>
    %69 = arith.mulf %68, %35 : vector<16x80xf32>
    %cst_35 = arith.constant 0.000000e+00 : f32
    %70 = vector.broadcast %cst_35 : f32 to vector<16x96xf32>
    %cst_36 = arith.constant 0.000000e+00 : f32
    %71 = vector.broadcast %cst_36 : f32 to vector<16x336xf32>
    %72 = tpu.concatenate %70, %69, %71 in 1 : vector<16x96xf32>, vector<16x80xf32>, vector<16x336xf32> -> vector<16x512xf32>
    %73 = vector.extract_strided_slice %72 {offsets = [0, 0], sizes = [8, 512], strides = [1, 1]} : vector<16x512xf32> to vector<8x512xf32>
    %74 = vector.extract_strided_slice %72 {offsets = [8, 0], sizes = [8, 512], strides = [1, 1]} : vector<16x512xf32> to vector<8x512xf32>
    %cst_37 = arith.constant 0.000000e+00 : f32
    %75 = vector.broadcast %cst_37 : f32 to vector<8x128xf32>
    %76 = vector.extract_strided_slice %74 {offsets = [0, 0], sizes = [8, 384], strides = [1, 1]} : vector<8x512xf32> to vector<8x384xf32>
    %77 = tpu.concatenate %75, %76 in 1 : vector<8x128xf32>, vector<8x384xf32> -> vector<8x512xf32>
    %78 = arith.addf %73, %77 : vector<8x512xf32>
    %79 = vector.extract_strided_slice %78 {offsets = [0, 0], sizes = [4, 512], strides = [1, 1]} : vector<8x512xf32> to vector<4x512xf32>
    %80 = vector.extract_strided_slice %78 {offsets = [4, 0], sizes = [4, 512], strides = [1, 1]} : vector<8x512xf32> to vector<4x512xf32>
    %cst_38 = arith.constant 0.000000e+00 : f32
    %81 = vector.broadcast %cst_38 : f32 to vector<4x64xf32>
    %82 = vector.extract_strided_slice %80 {offsets = [0, 0], sizes = [4, 448], strides = [1, 1]} : vector<4x512xf32> to vector<4x448xf32>
    %83 = tpu.concatenate %81, %82 in 1 : vector<4x64xf32>, vector<4x448xf32> -> vector<4x512xf32>
    %84 = arith.addf %79, %83 : vector<4x512xf32>
    %85 = vector.extract_strided_slice %84 {offsets = [0, 0], sizes = [2, 512], strides = [1, 1]} : vector<4x512xf32> to vector<2x512xf32>
    %86 = vector.extract_strided_slice %84 {offsets = [2, 0], sizes = [2, 512], strides = [1, 1]} : vector<4x512xf32> to vector<2x512xf32>
    %cst_39 = arith.constant 0.000000e+00 : f32
    %87 = vector.broadcast %cst_39 : f32 to vector<2x32xf32>
    %88 = vector.extract_strided_slice %86 {offsets = [0, 0], sizes = [2, 480], strides = [1, 1]} : vector<2x512xf32> to vector<2x480xf32>
    %89 = tpu.concatenate %87, %88 in 1 : vector<2x32xf32>, vector<2x480xf32> -> vector<2x512xf32>
    %90 = arith.addf %85, %89 : vector<2x512xf32>
    %91 = vector.extract_strided_slice %90 {offsets = [0, 0], sizes = [1, 512], strides = [1, 1]} : vector<2x512xf32> to vector<1x512xf32>
    %92 = vector.extract_strided_slice %90 {offsets = [1, 0], sizes = [1, 512], strides = [1, 1]} : vector<2x512xf32> to vector<1x512xf32>
    %cst_40 = arith.constant 0.000000e+00 : f32
    %93 = vector.broadcast %cst_40 : f32 to vector<1x16xf32>
    %94 = vector.extract_strided_slice %92 {offsets = [0, 0], sizes = [1, 496], strides = [1, 1]} : vector<1x512xf32> to vector<1x496xf32>
    %95 = tpu.concatenate %93, %94 in 1 : vector<1x16xf32>, vector<1x496xf32> -> vector<1x512xf32>
    %96 = arith.addf %91, %95 : vector<1x512xf32>
    %97 = vector.broadcast %67 : vector<16x1xf32> to vector<16x80xf32>
    %98 = arith.mulf %97, %35 : vector<16x80xf32>
    %cst_41 = arith.constant 0.000000e+00 : f32
    %99 = vector.broadcast %cst_41 : f32 to vector<16x96xf32>
    %cst_42 = arith.constant 0.000000e+00 : f32
    %100 = vector.broadcast %cst_42 : f32 to vector<16x336xf32>
    %101 = tpu.concatenate %99, %98, %100 in 1 : vector<16x96xf32>, vector<16x80xf32>, vector<16x336xf32> -> vector<16x512xf32>
    %102 = vector.extract_strided_slice %101 {offsets = [0, 0], sizes = [8, 512], strides = [1, 1]} : vector<16x512xf32> to vector<8x512xf32>
    %103 = vector.extract_strided_slice %101 {offsets = [8, 0], sizes = [8, 512], strides = [1, 1]} : vector<16x512xf32> to vector<8x512xf32>
    %cst_43 = arith.constant 0.000000e+00 : f32
    %104 = vector.broadcast %cst_43 : f32 to vector<8x128xf32>
    %105 = vector.extract_strided_slice %103 {offsets = [0, 0], sizes = [8, 384], strides = [1, 1]} : vector<8x512xf32> to vector<8x384xf32>
    %106 = tpu.concatenate %104, %105 in 1 : vector<8x128xf32>, vector<8x384xf32> -> vector<8x512xf32>
    %107 = arith.addf %102, %106 : vector<8x512xf32>
    %108 = vector.extract_strided_slice %107 {offsets = [0, 0], sizes = [4, 512], strides = [1, 1]} : vector<8x512xf32> to vector<4x512xf32>
    %109 = vector.extract_strided_slice %107 {offsets = [4, 0], sizes = [4, 512], strides = [1, 1]} : vector<8x512xf32> to vector<4x512xf32>
    %cst_44 = arith.constant 0.000000e+00 : f32
    %110 = vector.broadcast %cst_44 : f32 to vector<4x64xf32>
    %111 = vector.extract_strided_slice %109 {offsets = [0, 0], sizes = [4, 448], strides = [1, 1]} : vector<4x512xf32> to vector<4x448xf32>
    %112 = tpu.concatenate %110, %111 in 1 : vector<4x64xf32>, vector<4x448xf32> -> vector<4x512xf32>
    %113 = arith.addf %108, %112 : vector<4x512xf32>
    %114 = vector.extract_strided_slice %113 {offsets = [0, 0], sizes = [2, 512], strides = [1, 1]} : vector<4x512xf32> to vector<2x512xf32>
    %115 = vector.extract_strided_slice %113 {offsets = [2, 0], sizes = [2, 512], strides = [1, 1]} : vector<4x512xf32> to vector<2x512xf32>
    %cst_45 = arith.constant 0.000000e+00 : f32
    %116 = vector.broadcast %cst_45 : f32 to vector<2x32xf32>
    %117 = vector.extract_strided_slice %115 {offsets = [0, 0], sizes = [2, 480], strides = [1, 1]} : vector<2x512xf32> to vector<2x480xf32>
    %118 = tpu.concatenate %116, %117 in 1 : vector<2x32xf32>, vector<2x480xf32> -> vector<2x512xf32>
    %119 = arith.addf %114, %118 : vector<2x512xf32>
    %120 = vector.extract_strided_slice %119 {offsets = [0, 0], sizes = [1, 512], strides = [1, 1]} : vector<2x512xf32> to vector<1x512xf32>
    %121 = vector.extract_strided_slice %119 {offsets = [1, 0], sizes = [1, 512], strides = [1, 1]} : vector<2x512xf32> to vector<1x512xf32>
    %cst_46 = arith.constant 0.000000e+00 : f32
    %122 = vector.broadcast %cst_46 : f32 to vector<1x16xf32>
    %123 = vector.extract_strided_slice %121 {offsets = [0, 0], sizes = [1, 496], strides = [1, 1]} : vector<1x512xf32> to vector<1x496xf32>
    %124 = tpu.concatenate %122, %123 in 1 : vector<1x16xf32>, vector<1x496xf32> -> vector<1x512xf32>
    %125 = arith.addf %120, %124 : vector<1x512xf32>
    %126 = tpu.concatenate %96, %125 in 0 : vector<1x512xf32>, vector<1x512xf32> -> vector<2x512xf32>
    %127 = vector.extract_strided_slice %126 {offsets = [0, 128], sizes = [2, 256], strides = [1, 1]} : vector<2x512xf32> to vector<2x256xf32>
    %128 = arith.truncf %127 : vector<2x256xf32> to vector<2x256xbf16>
    %c0_47 = arith.constant 0 : index
    %c0_48 = arith.constant 0 : index
    %c0_49 = arith.constant 0 : index
    %129 = vector.load %arg11[%c0_47, %c0_48, %c0_49] : memref<1x256x512xbf16, #tpu.memory_space<vmem>>, vector<1x256x512xbf16>
    %130 = vector.shape_cast %129 : vector<1x256x512xbf16> to vector<256x512xbf16>
    %cst_50 = arith.constant dense<0.000000e+00> : vector<2x512xf32>
    %131 = tpu.matmul %128, %130, %cst_50 {dimension_numbers = #tpu.dot_dimension_numbers<[1], [0], [0], [1], [0, 0, 1, 1], [], []>} : vector<2x256xbf16>, vector<256x512xbf16>, vector<2x512xf32> -> vector<2x512xf32>
    %132 = vector.extract_strided_slice %131 {offsets = [0, 0], sizes = [1, 256], strides = [1, 1]} : vector<2x512xf32> to vector<1x256xf32>
    %133 = vector.extract_strided_slice %131 {offsets = [1, 256], sizes = [1, 256], strides = [1, 1]} : vector<2x512xf32> to vector<1x256xf32>
    %134 = arith.subf %132, %133 : vector<1x256xf32>
    %135 = vector.extract_strided_slice %131 {offsets = [1, 0], sizes = [1, 256], strides = [1, 1]} : vector<2x512xf32> to vector<1x256xf32>
    %136 = vector.extract_strided_slice %131 {offsets = [0, 256], sizes = [1, 256], strides = [1, 1]} : vector<2x512xf32> to vector<1x256xf32>
    %137 = arith.addf %135, %136 : vector<1x256xf32>
    %138 = tpu.concatenate %134, %137 in 0 : vector<1x256xf32>, vector<1x256xf32> -> vector<2x256xf32>
    %c0_51 = arith.constant 0 : index
    %c0_52 = arith.constant 0 : index
    %c0_53 = arith.constant 0 : index
    %139 = vector.load %arg12[%c0_51, %c0_52, %c0_53] : memref<1x2x256xf32, #tpu.memory_space<vmem>>, vector<1x2x256xf32>
    %140 = vector.shape_cast %139 : vector<1x2x256xf32> to vector<2x256xf32>
    %141 = vector.shape_cast %138 : vector<2x256xf32> to vector<1x2x256xf32>
    tpu.vector_store %arg12[%c0_51, %c0_52, %c0_53], %141 {strides = array<i32>} : memref<1x2x256xf32, #tpu.memory_space<vmem>>, vector<1x2x256xf32>,
    return
  }
  func.func @transform_0(%arg0: i32) -> (i32, i32) {
    %c0_i32 = arith.constant 0 : i32
    %c0_i32_0 = arith.constant 0 : i32
    %c0_i32_1 = arith.constant 0 : i32
    return %c0_i32, %c0_i32_0 : i32, i32
  }
  func.func @transform_1(%arg0: i32) -> (i32, i32) {
    %c0_i32 = arith.constant 0 : i32
    %c0_i32_0 = arith.constant 0 : i32
    %c0_i32_1 = arith.constant 0 : i32
    return %c0_i32, %c0_i32_0 : i32, i32
  }
  func.func @transform_2(%arg0: i32) -> (i32, i32) {
    %c0_i32 = arith.constant 0 : i32
    %c0_i32_0 = arith.constant 0 : i32
    %c0_i32_1 = arith.constant 0 : i32
    return %c0_i32, %c0_i32_0 : i32, i32
  }
  func.func @transform_3(%arg0: i32) -> (i32, i32, i32) {
    %c0_i32 = arith.constant 0 : i32
    %c0_i32_0 = arith.constant 0 : i32
    %c0_i32_1 = arith.constant 0 : i32
    return %arg0, %c0_i32, %c0_i32_0 : i32, i32, i32
  }
  func.func @transform_4(%arg0: i32) -> (i32, i32, i32) {
    %c0_i32 = arith.constant 0 : i32
    %c0_i32_0 = arith.constant 0 : i32
    %c0_i32_1 = arith.constant 0 : i32
    return %arg0, %c0_i32, %c0_i32_0 : i32, i32, i32
  }
  func.func @transform_5(%arg0: i32) -> (i32, i32, i32) {
    %c0_i32 = arith.constant 0 : i32
    %c0_i32_0 = arith.constant 0 : i32
    %c0_i32_1 = arith.constant 0 : i32
    return %arg0, %c0_i32, %c0_i32_0 : i32, i32, i32
  }
  func.func @transform_6(%arg0: i32) -> (i32, i32, i32) {
    %c0_i32 = arith.constant 0 : i32
    %c0_i32_0 = arith.constant 0 : i32
    %c0_i32_1 = arith.constant 0 : i32
    return %arg0, %c0_i32, %c0_i32_0 : i32, i32, i32
  }
  func.func @transform_7(%arg0: i32) -> (i32, i32, i32) {
    %c0_i32 = arith.constant 0 : i32
    %c0_i32_0 = arith.constant 0 : i32
    %c0_i32_1 = arith.constant 0 : i32
    return %arg0, %c0_i32, %c0_i32_0 : i32, i32, i32
  }
  func.func @transform_8(%arg0: i32) -> (i32, i32, i32) {
    %c0_i32 = arith.constant 0 : i32
    %c0_i32_0 = arith.constant 0 : i32
    %c0_i32_1 = arith.constant 0 : i32
    return %arg0, %c0_i32, %c0_i32_0 : i32, i32, i32
  }
  func.func @transform_9(%arg0: i32) -> (i32, i32, i32) {
    %c0_i32 = arith.constant 0 : i32
    %c0_i32_0 = arith.constant 0 : i32
    %c0_i32_1 = arith.constant 0 : i32
    return %arg0, %c0_i32, %c0_i32_0 : i32, i32, i32
  }
  func.func @transform_10(%arg0: i32) -> (i32, i32, i32) {
    %c0_i32 = arith.constant 0 : i32
    %c0_i32_0 = arith.constant 0 : i32
    %c0_i32_1 = arith.constant 0 : i32
    return %arg0, %c0_i32, %c0_i32_0 : i32, i32, i32
  }
  func.func @transform_11(%arg0: i32) -> (i32, i32, i32) {
    %c0_i32 = arith.constant 0 : i32
    %c0_i32_0 = arith.constant 0 : i32
    %c0_i32_1 = arith.constant 0 : i32
    return %arg0, %c0_i32, %c0_i32_0 : i32, i32, i32
  }
}

module attributes {stable_mosaic.version = 11 : i64} {
  func.func @_scmt_fused_kernel(%arg0: i32, %arg1: memref<16x1xf32, #tpu.memory_space<vmem>>, %arg2: memref<16x80xf32, #tpu.memory_space<vmem>>, %arg3: memref<16x80xf32, #tpu.memory_space<vmem>>, %arg4: memref<1x1x1xf32, #tpu.memory_space<vmem>>, %arg5: memref<1x1x64xf32, #tpu.memory_space<vmem>>, %arg6: memref<1x1x64xf32, #tpu.memory_space<vmem>>, %arg7: memref<1x64x64xf32, #tpu.memory_space<vmem>>, %arg8: memref<1x1x64xf32, #tpu.memory_space<vmem>>, %arg9: memref<1x64x81xf32, #tpu.memory_space<vmem>>, %arg10: memref<1x1x81xf32, #tpu.memory_space<vmem>>, %arg11: memref<1x256x512xbf16, #tpu.memory_space<vmem>>, %arg12: memref<1x2x256xf32, #tpu.memory_space<vmem>>) attributes {dimension_semantics = [#tpu.dimension_semantics<arbitrary>], iteration_bounds = array<i64: 2>, scalar_prefetch = 0 : i64, scratch_operands = 0 : i64, tpu.core_type = #tpu.core_type<tc>, window_params = [{pipeline_mode = #tpu.pipeline_mode<synchronous>, transform_indices = @transform_0, window_bounds = array<i64: 16, 1>}, {pipeline_mode = #tpu.pipeline_mode<synchronous>, transform_indices = @transform_1, window_bounds = array<i64: 16, 80>}, {pipeline_mode = #tpu.pipeline_mode<synchronous>, transform_indices = @transform_2, window_bounds = array<i64: 16, 80>}, {transform_indices = @transform_3, window_bounds = array<i64: 1, 1, 1>}, {transform_indices = @transform_4, window_bounds = array<i64: 1, 1, 64>}, {transform_indices = @transform_5, window_bounds = array<i64: 1, 1, 64>}, {transform_indices = @transform_6, window_bounds = array<i64: 1, 64, 64>}, {transform_indices = @transform_7, window_bounds = array<i64: 1, 1, 64>}, {transform_indices = @transform_8, window_bounds = array<i64: 1, 64, 81>}, {transform_indices = @transform_9, window_bounds = array<i64: 1, 1, 81>}, {transform_indices = @transform_10, window_bounds = array<i64: 1, 256, 512>}, {transform_indices = @transform_11, window_bounds = array<i64: 1, 2, 256>}]} {
    %c0 = arith.constant 0 : index
    %c0_0 = arith.constant 0 : index
    %0 = vector.load %arg1[%c0, %c0_0] : memref<16x1xf32, #tpu.memory_space<vmem>>, vector<16x1xf32>
    %1 = arith.negf %0 : vector<16x1xf32>
    %2 = math.exp %1 : vector<16x1xf32>
    %cst = arith.constant 1.000000e+00 : f32
    %3 = vector.broadcast %cst : f32 to vector<16x1xf32>
    %4 = arith.addf %3, %2 : vector<16x1xf32>
    %5 = arith.divf %3, %4 : vector<16x1xf32>
    %cst_1 = arith.constant 1.800000e-01 : f32
    %6 = vector.broadcast %cst_1 : f32 to vector<16x1xf32>
    %7 = arith.mulf %5, %6 : vector<16x1xf32>
    %cst_2 = arith.constant 1.200000e-01 : f32
    %8 = vector.broadcast %cst_2 : f32 to vector<16x1xf32>
    %9 = arith.addf %7, %8 : vector<16x1xf32>
    %c0_3 = arith.constant 0 : index
    %c0_4 = arith.constant 0 : index
    %c0_5 = arith.constant 0 : index
    %10 = vector.load %arg5[%c0_3, %c0_4, %c0_5] : memref<1x1x64xf32, #tpu.memory_space<vmem>>, vector<1x1x64xf32>
    %11 = vector.shape_cast %10 : vector<1x1x64xf32> to vector<1x64xf32>
    %12 = vector.broadcast %9 : vector<16x1xf32> to vector<16x64xf32>
    %13 = vector.broadcast %11 : vector<1x64xf32> to vector<16x64xf32>
    %14 = arith.mulf %12, %13 : vector<16x64xf32>
    %c0_6 = arith.constant 0 : index
    %c0_7 = arith.constant 0 : index
    %c0_8 = arith.constant 0 : index
    %15 = vector.load %arg6[%c0_6, %c0_7, %c0_8] : memref<1x1x64xf32, #tpu.memory_space<vmem>>, vector<1x1x64xf32>
    %16 = vector.shape_cast %15 : vector<1x1x64xf32> to vector<1x64xf32>
    %17 = vector.broadcast %16 : vector<1x64xf32> to vector<16x64xf32>
    %18 = arith.addf %14, %17 : vector<16x64xf32>
    %19 = math.tanh %18 : vector<16x64xf32>
    %c0_9 = arith.constant 0 : index
    %c0_10 = arith.constant 0 : index
    %c0_11 = arith.constant 0 : index
    %20 = vector.load %arg7[%c0_9, %c0_10, %c0_11] : memref<1x64x64xf32, #tpu.memory_space<vmem>>, vector<1x64x64xf32>
    %21 = vector.shape_cast %20 : vector<1x64x64xf32> to vector<64x64xf32>
    %cst_12 = arith.constant dense<0.000000e+00> : vector<16x64xf32>
    %22 = tpu.matmul %19, %21, %cst_12 {dimension_numbers = #tpu.dot_dimension_numbers<[1], [0], [0], [1], [0, 0, 1, 1], [], []>} : vector<16x64xf32>, vector<64x64xf32>, vector<16x64xf32> -> vector<16x64xf32>
    %c0_13 = arith.constant 0 : index
    %c0_14 = arith.constant 0 : index
    %c0_15 = arith.constant 0 : index
    %23 = vector.load %arg8[%c0_13, %c0_14, %c0_15] : memref<1x1x64xf32, #tpu.memory_space<vmem>>, vector<1x1x64xf32>
    %24 = vector.shape_cast %23 : vector<1x1x64xf32> to vector<1x64xf32>
    %25 = vector.broadcast %24 : vector<1x64xf32> to vector<16x64xf32>
    %26 = arith.addf %22, %25 : vector<16x64xf32>
    %27 = math.tanh %26 : vector<16x64xf32>
    %c0_16 = arith.constant 0 : index
    %c0_17 = arith.constant 0 : index
    %c0_18 = arith.constant 0 : index
    %28 = vector.load %arg9[%c0_16, %c0_17, %c0_18] : memref<1x64x81xf32, #tpu.memory_space<vmem>>, vector<1x64x81xf32>
    %29 = vector.shape_cast %28 : vector<1x64x81xf32> to vector<64x81xf32>
    %cst_19 = arith.constant dense<0.000000e+00> : vector<16x81xf32>
    %30 = tpu.matmul %27, %29, %cst_19 {dimension_numbers = #tpu.dot_dimension_numbers<[1], [0], [0], [1], [0, 0, 1, 1], [], []>} : vector<16x64xf32>, vector<64x81xf32>, vector<16x81xf32> -> vector<16x81xf32>
    %c0_20 = arith.constant 0 : index
    %c0_21 = arith.constant 0 : index
    %c0_22 = arith.constant 0 : index
    %31 = vector.load %arg10[%c0_20, %c0_21, %c0_22] : memref<1x1x81xf32, #tpu.memory_space<vmem>>, vector<1x1x81xf32>
    %32 = vector.shape_cast %31 : vector<1x1x81xf32> to vector<1x81xf32>
    %33 = vector.broadcast %32 : vector<1x81xf32> to vector<16x81xf32>
    %34 = arith.addf %30, %33 : vector<16x81xf32>
    %35 = vector.extract_strided_slice %34 {offsets = [0, 0], sizes = [16, 80], strides = [1, 1]} : vector<16x81xf32> to vector<16x80xf32>
    %36 = vector.extract_strided_slice %34 {offsets = [0, 80], sizes = [16, 1], strides = [1, 1]} : vector<16x81xf32> to vector<16x1xf32>
    %37 = arith.negf %36 : vector<16x1xf32>
    %38 = math.exp %37 : vector<16x1xf32>
    %cst_23 = arith.constant 1.000000e+00 : f32
    %39 = vector.broadcast %cst_23 : f32 to vector<16x1xf32>
    %40 = arith.addf %39, %38 : vector<16x1xf32>
    %41 = arith.divf %39, %40 : vector<16x1xf32>
    %cst_24 = arith.constant 1.000000e+00 : f32
    %42 = vector.broadcast %cst_24 : f32 to vector<16x1xf32>
    %43 = arith.addf %42, %41 : vector<16x1xf32>
    %c0_25 = arith.constant 0 : index
    %c0_26 = arith.constant 0 : index
    %44 = vector.load %arg2[%c0_25, %c0_26] : memref<16x80xf32, #tpu.memory_space<vmem>>, vector<16x80xf32>
    %45 = arith.mulf %35, %44 : vector<16x80xf32>
    %cst_27 = arith.constant dense<0.000000e+00> : vector<16xf32>
    %46 = vector.multi_reduction <add>, %45, %cst_27 [1] : vector<16x80xf32> to vector<16xf32>
    %47 = vector.shape_cast %46 : vector<16xf32> to vector<16x1xf32>
    %c0_28 = arith.constant 0 : index
    %c0_29 = arith.constant 0 : index
    %48 = vector.load %arg3[%c0_28, %c0_29] : memref<16x80xf32, #tpu.memory_space<vmem>>, vector<16x80xf32>
    %49 = arith.mulf %35, %48 : vector<16x80xf32>
    %cst_30 = arith.constant dense<0.000000e+00> : vector<16xf32>
    %50 = vector.multi_reduction <add>, %49, %cst_30 [1] : vector<16x80xf32> to vector<16xf32>
    %51 = vector.shape_cast %50 : vector<16xf32> to vector<16x1xf32>
    %c0_31 = arith.constant 0 : index
    %c0_32 = arith.constant 0 : index
    %c0_33 = arith.constant 0 : index
    %52 = vector.load %arg4[%c0_31, %c0_32, %c0_33] : memref<1x1x1xf32, #tpu.memory_space<vmem>>, vector<1x1x1xf32>
    %53 = vector.shape_cast %52 : vector<1x1x1xf32> to vector<1x1xf32>
    %54 = vector.broadcast %53 : vector<1x1xf32> to vector<16x1xf32>
    %55 = arith.mulf %43, %54 : vector<16x1xf32>
    %56 = math.cos %55 : vector<16x1xf32>
    %57 = math.sin %55 : vector<16x1xf32>
    %cst_34 = arith.constant 4.380000e-02 : f32
    %58 = vector.broadcast %cst_34 : f32 to vector<16x1xf32>
    %59 = arith.mulf %58, %43 : vector<16x1xf32>
    %60 = arith.mulf %56, %47 : vector<16x1xf32>
    %61 = arith.mulf %57, %51 : vector<16x1xf32>
    %62 = arith.subf %60, %61 : vector<16x1xf32>
    %63 = arith.mulf %59, %62 : vector<16x1xf32>
    %64 = arith.mulf %57, %47 : vector<16x1xf32>
    %65 = arith.mulf %56, %51 : vector<16x1xf32>
    %66 = arith.addf %64, %65 : vector<16x1xf32>
    %67 = arith.mulf %59, %66 : vector<16x1xf32>
    %68 = vector.broadcast %63 : vector<16x1xf32> to vector<16x80xf32>
    %69 = arith.mulf %68, %35 : vector<16x80xf32>
    %cst_35 = arith.constant 0.000000e+00 : f32
    %70 = vector.broadcast %cst_35 : f32 to vector<16x96xf32>
    %cst_36 = arith.constant 0.000000e+00 : f32
    %71 = vector.broadcast %cst_36 : f32 to vector<16x336xf32>
    %72 = tpu.concatenate %70, %69, %71 in 1 : vector<16x96xf32>, vector<16x80xf32>, vector<16x336xf32> -> vector<16x512xf32>
    %73 = vector.extract_strided_slice %72 {offsets = [0, 0], sizes = [8, 512], strides = [1, 1]} : vector<16x512xf32> to vector<8x512xf32>
    %74 = vector.extract_strided_slice %72 {offsets = [8, 0], sizes = [8, 512], strides = [1, 1]} : vector<16x512xf32> to vector<8x512xf32>
    %cst_37 = arith.constant 0.000000e+00 : f32
    %75 = vector.broadcast %cst_37 : f32 to vector<8x128xf32>
    %76 = vector.extract_strided_slice %74 {offsets = [0, 0], sizes = [8, 384], strides = [1, 1]} : vector<8x512xf32> to vector<8x384xf32>
    %77 = tpu.concatenate %75, %76 in 1 : vector<8x128xf32>, vector<8x384xf32> -> vector<8x512xf32>
    %78 = arith.addf %73, %77 : vector<8x512xf32>
    %79 = vector.extract_strided_slice %78 {offsets = [0, 0], sizes = [4, 512], strides = [1, 1]} : vector<8x512xf32> to vector<4x512xf32>
    %80 = vector.extract_strided_slice %78 {offsets = [4, 0], sizes = [4, 512], strides = [1, 1]} : vector<8x512xf32> to vector<4x512xf32>
    %cst_38 = arith.constant 0.000000e+00 : f32
    %81 = vector.broadcast %cst_38 : f32 to vector<4x64xf32>
    %82 = vector.extract_strided_slice %80 {offsets = [0, 0], sizes = [4, 448], strides = [1, 1]} : vector<4x512xf32> to vector<4x448xf32>
    %83 = tpu.concatenate %81, %82 in 1 : vector<4x64xf32>, vector<4x448xf32> -> vector<4x512xf32>
    %84 = arith.addf %79, %83 : vector<4x512xf32>
    %85 = vector.extract_strided_slice %84 {offsets = [0, 0], sizes = [2, 512], strides = [1, 1]} : vector<4x512xf32> to vector<2x512xf32>
    %86 = vector.extract_strided_slice %84 {offsets = [2, 0], sizes = [2, 512], strides = [1, 1]} : vector<4x512xf32> to vector<2x512xf32>
    %cst_39 = arith.constant 0.000000e+00 : f32
    %87 = vector.broadcast %cst_39 : f32 to vector<2x32xf32>
    %88 = vector.extract_strided_slice %86 {offsets = [0, 0], sizes = [2, 480], strides = [1, 1]} : vector<2x512xf32> to vector<2x480xf32>
    %89 = tpu.concatenate %87, %88 in 1 : vector<2x32xf32>, vector<2x480xf32> -> vector<2x512xf32>
    %90 = arith.addf %85, %89 : vector<2x512xf32>
    %91 = vector.extract_strided_slice %90 {offsets = [0, 0], sizes = [1, 512], strides = [1, 1]} : vector<2x512xf32> to vector<1x512xf32>
    %92 = vector.extract_strided_slice %90 {offsets = [1, 0], sizes = [1, 512], strides = [1, 1]} : vector<2x512xf32> to vector<1x512xf32>
    %cst_40 = arith.constant 0.000000e+00 : f32
    %93 = vector.broadcast %cst_40 : f32 to vector<1x16xf32>
    %94 = vector.extract_strided_slice %92 {offsets = [0, 0], sizes = [1, 496], strides = [1, 1]} : vector<1x512xf32> to vector<1x496xf32>
    %95 = tpu.concatenate %93, %94 in 1 : vector<1x16xf32>, vector<1x496xf32> -> vector<1x512xf32>
    %96 = arith.addf %91, %95 : vector<1x512xf32>
    %97 = vector.broadcast %67 : vector<16x1xf32> to vector<16x80xf32>
    %98 = arith.mulf %97, %35 : vector<16x80xf32>
    %cst_41 = arith.constant 0.000000e+00 : f32
    %99 = vector.broadcast %cst_41 : f32 to vector<16x96xf32>
    %cst_42 = arith.constant 0.000000e+00 : f32
    %100 = vector.broadcast %cst_42 : f32 to vector<16x336xf32>
    %101 = tpu.concatenate %99, %98, %100 in 1 : vector<16x96xf32>, vector<16x80xf32>, vector<16x336xf32> -> vector<16x512xf32>
    %102 = vector.extract_strided_slice %101 {offsets = [0, 0], sizes = [8, 512], strides = [1, 1]} : vector<16x512xf32> to vector<8x512xf32>
    %103 = vector.extract_strided_slice %101 {offsets = [8, 0], sizes = [8, 512], strides = [1, 1]} : vector<16x512xf32> to vector<8x512xf32>
    %cst_43 = arith.constant 0.000000e+00 : f32
    %104 = vector.broadcast %cst_43 : f32 to vector<8x128xf32>
    %105 = vector.extract_strided_slice %103 {offsets = [0, 0], sizes = [8, 384], strides = [1, 1]} : vector<8x512xf32> to vector<8x384xf32>
    %106 = tpu.concatenate %104, %105 in 1 : vector<8x128xf32>, vector<8x384xf32> -> vector<8x512xf32>
    %107 = arith.addf %102, %106 : vector<8x512xf32>
    %108 = vector.extract_strided_slice %107 {offsets = [0, 0], sizes = [4, 512], strides = [1, 1]} : vector<8x512xf32> to vector<4x512xf32>
    %109 = vector.extract_strided_slice %107 {offsets = [4, 0], sizes = [4, 512], strides = [1, 1]} : vector<8x512xf32> to vector<4x512xf32>
    %cst_44 = arith.constant 0.000000e+00 : f32
    %110 = vector.broadcast %cst_44 : f32 to vector<4x64xf32>
    %111 = vector.extract_strided_slice %109 {offsets = [0, 0], sizes = [4, 448], strides = [1, 1]} : vector<4x512xf32> to vector<4x448xf32>
    %112 = tpu.concatenate %110, %111 in 1 : vector<4x64xf32>, vector<4x448xf32> -> vector<4x512xf32>
    %113 = arith.addf %108, %112 : vector<4x512xf32>
    %114 = vector.extract_strided_slice %113 {offsets = [0, 0], sizes = [2, 512], strides = [1, 1]} : vector<4x512xf32> to vector<2x512xf32>
    %115 = vector.extract_strided_slice %113 {offsets = [2, 0], sizes = [2, 512], strides = [1, 1]} : vector<4x512xf32> to vector<2x512xf32>
    %cst_45 = arith.constant 0.000000e+00 : f32
    %116 = vector.broadcast %cst_45 : f32 to vector<2x32xf32>
    %117 = vector.extract_strided_slice %115 {offsets = [0, 0], sizes = [2, 480], strides = [1, 1]} : vector<2x512xf32> to vector<2x480xf32>
    %118 = tpu.concatenate %116, %117 in 1 : vector<2x32xf32>, vector<2x480xf32> -> vector<2x512xf32>
    %119 = arith.addf %114, %118 : vector<2x512xf32>
    %120 = vector.extract_strided_slice %119 {offsets = [0, 0], sizes = [1, 512], strides = [1, 1]} : vector<2x512xf32> to vector<1x512xf32>
    %121 = vector.extract_strided_slice %119 {offsets = [1, 0], sizes = [1, 512], strides = [1, 1]} : vector<2x512xf32> to vector<1x512xf32>
    %cst_46 = arith.constant 0.000000e+00 : f32
    %122 = vector.broadcast %cst_46 : f32 to vector<1x16xf32>
    %123 = vector.extract_strided_slice %121 {offsets = [0, 0], sizes = [1, 496], strides = [1, 1]} : vector<1x512xf32> to vector<1x496xf32>
    %124 = tpu.concatenate %122, %123 in 1 : vector<1x16xf32>, vector<1x496xf32> -> vector<1x512xf32>
    %125 = arith.addf %120, %124 : vector<1x512xf32>
    %126 = tpu.concatenate %96, %125 in 0 : vector<1x512xf32>, vector<1x512xf32> -> vector<2x512xf32>
    %127 = vector.extract_strided_slice %126 {offsets = [0, 128], sizes = [2, 256], strides = [1, 1]} : vector<2x512xf32> to vector<2x256xf32>
    %128 = arith.truncf %127 : vector<2x256xf32> to vector<2x256xbf16>
    %c0_47 = arith.constant 0 : index
    %c0_48 = arith.constant 0 : index
    %c0_49 = arith.constant 0 : index
    %129 = vector.load %arg11[%c0_47, %c0_48, %c0_49] : memref<1x256x512xbf16, #tpu.memory_space<vmem>>, vector<1x256x512xbf16>
    %130 = vector.shape_cast %129 : vector<1x256x512xbf16> to vector<256x512xbf16>
    %cst_50 = arith.constant dense<0.000000e+00> : vector<2x512xf32>
    %131 = tpu.matmul %128, %130, %cst_50 {dimension_numbers = #tpu.dot_dimension_numbers<[1], [0], [0], [1], [0, 0, 1, 1], [], []>} : vector<2x256xbf16>, vector<256x512xbf16>, vector<2x512xf32> -> vector<2x512xf32>
    %132 = vector.extract_strided_slice %131 {offsets = [0, 0], sizes = [1, 256], strides = [1, 1]} : vector<2x512xf32> to vector<1x256xf32>
    %133 = vector.extract_strided_slice %131 {offsets = [1, 256], sizes = [1, 256], strides = [1, 1]} : vector<2x512xf32> to vector<1x256xf32>
    %134 = arith.subf %132, %133 : vector<1x256xf32>
    %135 = vector.extract_strided_slice %131 {offsets = [1, 0], sizes = [1, 256], strides = [1, 1]} : vector<2x512xf32> to vector<1x256xf32>
    %136 = vector.extract_strided_slice %131 {offsets = [0, 256], sizes = [1, 256], strides = [1, 1]} : vector<2x512xf32> to vector<1x256xf32>
    %137 = arith.addf %135, %136 : vector<1x256xf32>
    %138 = tpu.concatenate %134, %137 in 0 : vector<1x256xf32>, vector<1x256xf32> -> vector<2x256xf32>
    %c0_51 = arith.constant 0 : index
    %c0_52 = arith.constant 0 : index
    %c0_53 = arith.constant 0 : index
    %139 = vector.load %arg12[%c0_51, %c0_52, %c0_53] : memref<1x2x256xf32, #tpu.memory_space<vmem>>, vector<1x2x256xf32>
    %140 = vector.shape_cast %139 : vector<1x2x256xf32> to vector<2x256xf32>
    %141 = vector.shape_cast %138 : vector<2x256xf32> to vector<1x2x256xf32>
    tpu.vector_store %arg12[%c0_51, %c0_52, %c0_53], %141 {strides = array<i32>} : memref<1x2x256xf32, #tpu.memory_space<vmem>>, vector<1x2x256xf32>,
    return
  }
  func.func @transform_0(%arg0: i32) -> (i32, i32) {
    %c0_i32 = arith.constant 0 : i32
    %c0_i32_0 = arith.constant 0 : i32
    %c0_i32_1 = arith.constant 0 : i32
    return %c0_i32, %c0_i32_0 : i32, i32
  }
  func.func @transform_1(%arg0: i32) -> (i32, i32) {
    %c0_i32 = arith.constant 0 : i32
    %c0_i32_0 = arith.constant 0 : i32
    %c0_i32_1 = arith.constant 0 : i32
    return %c0_i32, %c0_i32_0 : i32, i32
  }
  func.func @transform_2(%arg0: i32) -> (i32, i32) {
    %c0_i32 = arith.constant 0 : i32
    %c0_i32_0 = arith.constant 0 : i32
    %c0_i32_1 = arith.constant 0 : i32
    return %c0_i32, %c0_i32_0 : i32, i32
  }
  func.func @transform_3(%arg0: i32) -> (i32, i32, i32) {
    %c0_i32 = arith.constant 0 : i32
    %c0_i32_0 = arith.constant 0 : i32
    %c0_i32_1 = arith.constant 0 : i32
    return %arg0, %c0_i32, %c0_i32_0 : i32, i32, i32
  }
  func.func @transform_4(%arg0: i32) -> (i32, i32, i32) {
    %c0_i32 = arith.constant 0 : i32
    %c0_i32_0 = arith.constant 0 : i32
    %c0_i32_1 = arith.constant 0 : i32
    return %arg0, %c0_i32, %c0_i32_0 : i32, i32, i32
  }
  func.func @transform_5(%arg0: i32) -> (i32, i32, i32) {
    %c0_i32 = arith.constant 0 : i32
    %c0_i32_0 = arith.constant 0 : i32
    %c0_i32_1 = arith.constant 0 : i32
    return %arg0, %c0_i32, %c0_i32_0 : i32, i32, i32
  }
  func.func @transform_6(%arg0: i32) -> (i32, i32, i32) {
    %c0_i32 = arith.constant 0 : i32
    %c0_i32_0 = arith.constant 0 : i32
    %c0_i32_1 = arith.constant 0 : i32
    return %arg0, %c0_i32, %c0_i32_0 : i32, i32, i32
  }
  func.func @transform_7(%arg0: i32) -> (i32, i32, i32) {
    %c0_i32 = arith.constant 0 : i32
    %c0_i32_0 = arith.constant 0 : i32
    %c0_i32_1 = arith.constant 0 : i32
    return %arg0, %c0_i32, %c0_i32_0 : i32, i32, i32
  }
  func.func @transform_8(%arg0: i32) -> (i32, i32, i32) {
    %c0_i32 = arith.constant 0 : i32
    %c0_i32_0 = arith.constant 0 : i32
    %c0_i32_1 = arith.constant 0 : i32
    return %arg0, %c0_i32, %c0_i32_0 : i32, i32, i32
  }
  func.func @transform_9(%arg0: i32) -> (i32, i32, i32) {
    %c0_i32 = arith.constant 0 : i32
    %c0_i32_0 = arith.constant 0 : i32
    %c0_i32_1 = arith.constant 0 : i32
    return %arg0, %c0_i32, %c0_i32_0 : i32, i32, i32
  }
  func.func @transform_10(%arg0: i32) -> (i32, i32, i32) {
    %c0_i32 = arith.constant 0 : i32
    %c0_i32_0 = arith.constant 0 : i32
    %c0_i32_1 = arith.constant 0 : i32
    return %arg0, %c0_i32, %c0_i32_0 : i32, i32, i32
  }
  func.func @transform_11(%arg0: i32) -> (i32, i32, i32) {
    %c0_i32 = arith.constant 0 : i32
    %c0_i32_0 = arith.constant 0 : i32
    %c0_i32_1 = arith.constant 0 : i32
    return %arg0, %c0_i32, %c0_i32_0 : i32, i32, i32
  }
}

</mosaic_0001>

<llo_original>
// kernel: custom-call
$region0: #{custom-call}
  %s0 = inlined_call_operand.vmem [shape: f32[2,256], index: 0, kind: input, shape index: {}]
  %s1 = inlined_call_operand.vmem [shape: f32[2,256], index: 1, kind: input, shape index: {}]
  %s2 = inlined_call_operand.hbm [shape: c64[2,256], index: 2, kind: output, shape index: {}]
  %s3 = scalar_lea.hbm %s2, 4
  $region1: #{custom-call} parent=0
    #allocation0 [shape = 's32[1]{0}', space=sflag, size = 0x4, scoped, tag = 'scoped memory for custom-call']
    %4 = vsyncpa [#allocation0], 0
    %s6 = sshll.u32 %s0, 4
    %s7 = int_to_ptr.vmem [resolvable:$true] %s6
    %s8 = sshll.u32 %s2, 4
    %s9 = int_to_ptr.hbm [resolvable:$true] %s8
    %11 = dma.vmem_to_hbm [thread:$0]  %s7, 64, %s9, [#allocation0]
    %13 = dma.done [#allocation0], 64
    %14 = vsyncpa [#allocation0], 1
  $region2: #{custom-call} parent=0
    #allocation1 [shape = 's32[1]{0}', space=sflag, size = 0x4, scoped, tag = 'scoped memory for custom-call']
    %15 = vsyncpa [#allocation1], 0
    %s17 = sshll.u32 %s1, 4
    %s18 = int_to_ptr.vmem [resolvable:$true] %s17
    %s19 = sshll.u32 %s3, 4
    %s20 = int_to_ptr.hbm [resolvable:$true] %s19
    %22 = dma.vmem_to_hbm [thread:$0]  %s18, 64, %s20, [#allocation1]
    %24 = dma.done [#allocation1], 64
    %25 = vsyncpa [#allocation1], 1

// kernel: custom-call
$region0: #{custom-call}
  %s0 = inlined_call_operand.vmem [shape: f32[2,256], index: 0, kind: input, shape index: {}]
  %s1 = inlined_call_operand.vmem [shape: f32[2,256], index: 1, kind: input, shape index: {}]
  %s2 = inlined_call_operand.hbm [shape: c64[2,256], index: 2, kind: output, shape index: {}]
  %s3 = scalar_lea.hbm %s2, 4
  $region1: #{custom-call} parent=0
    #allocation0 [shape = 's32[1]{0}', space=sflag, size = 0x4, scoped, tag = 'scoped memory for custom-call']
    %4 = vsyncpa [#allocation0], 0
    %s6 = sshll.u32 %s0, 4
    %s7 = int_to_ptr.vmem [resolvable:$true] %s6
    %s8 = sshll.u32 %s2, 4
    %s9 = int_to_ptr.hbm [resolvable:$true] %s8
    %11 = dma.vmem_to_hbm [thread:$0]  %s7, 64, %s9, [#allocation0]
    %13 = dma.done [#allocation0], 64
    %14 = vsyncpa [#allocation0], 1
  $region2: #{custom-call} parent=0
    #allocation1 [shape = 's32[1]{0}', space=sflag, size = 0x4, scoped, tag = 'scoped memory for custom-call']
    %15 = vsyncpa [#allocation1], 0
    %s17 = sshll.u32 %s1, 4
    %s18 = int_to_ptr.vmem [resolvable:$true] %s17
    %s19 = sshll.u32 %s3, 4
    %s20 = int_to_ptr.hbm [resolvable:$true] %s19
    %22 = dma.vmem_to_hbm [thread:$0]  %s18, 64, %s20, [#allocation1]
    %24 = dma.done [#allocation1], 64
    %25 = vsyncpa [#allocation1], 1

// kernel: fwd.1
$region0: #{fwd.1}
  #allocation0 [shape = 'u32[]', space=smem, size = 0x4, offset = 0x4, fixed_abs, tag = 'smem constant byte address 0x4 - core index']
  #allocation1 [shape = 'u32[72,128]{1,0:T(1,128)}', space=vmem, size = 0x9000, scoped, tag = 'internal scratch']
  %s0 = inlined_call_operand.vmem [shape: f32[16,1], index: 0, kind: input, shape index: {}]
  %s1 = inlined_call_operand.vmem [shape: f32[16,80], index: 1, kind: input, shape index: {}]
  %s2 = inlined_call_operand.hbm [shape: f32[16,80], index: 2, kind: input, shape index: {}]
  %s3 = inlined_call_operand.vmem [shape: f32[2,1,1], index: 3, kind: input, shape index: {}]
  %s4 = inlined_call_operand.vmem [shape: f32[2,1,64], index: 4, kind: input, shape index: {}]
  %s5 = inlined_call_operand.vmem [shape: f32[2,1,64], index: 5, kind: input, shape index: {}]
  %s6 = inlined_call_operand.hbm [shape: f32[2,64,64], index: 6, kind: input, shape index: {}]
  %s7 = inlined_call_operand.vmem [shape: f32[2,1,64], index: 7, kind: input, shape index: {}]
  %s8 = inlined_call_operand.hbm [shape: f32[2,64,81], index: 8, kind: input, shape index: {}]
  %s9 = inlined_call_operand.vmem [shape: f32[2,1,81], index: 9, kind: input, shape index: {}]
  %s10 = inlined_call_operand.hbm [shape: bf16[2,256,512], index: 10, kind: input, shape index: {}]
  %s11 = inlined_call_operand.vmem [shape: f32[2,2,256], index: 11, kind: output, shape index: {}]
  %s12 = sld [smem:[#allocation0]]
  $region93: #{fwd.1} parent=0
    _
  %s14 = ssub.s32 1, %s12
  %s15 = scalar_select 0, %s14, %s12
  $region1: #{fwd.1} parent=0
    #allocation2 [shape = 'u8[8192]{0}', space=vmem, size = 0x2000, scoped, tag = 'input window, operand 2, single buffered']
    #allocation3 [shape = 's32[2]{0}', space=sflag, size = 0x8, scoped, tag = 'scoped memory for fwd.1']
    #allocation4 [shape = 'u8[65536]{0}', space=vmem, size = 0x10000, scoped, tag = 'input window, operand 6']
    #allocation5 [shape = 's32[2]{0}', space=sflag, size = 0x8, scoped, tag = 'scoped memory for fwd.1']
    #allocation6 [shape = 'u8[65536]{0}', space=vmem, size = 0x10000, scoped, tag = 'input window, operand 8']
    #allocation7 [shape = 'u8[524288]{0}', space=vmem, size = 0x80000, scoped, tag = 'input window, operand 10']
    #allocation8 [shape = 's32[2]{0}', space=sflag, size = 0x8, scoped, tag = 'scoped memory for fwd.1']
    %16 = vsyncpa [#allocation3], 0
    %17 = vsyncpa [#allocation5], 0
    %s18 = scalar_lea.sflag [#allocation5], 1
    %19 = vsyncpa %s18, 0
    %20 = vsyncpa [#allocation8], 0
    %s21 = scalar_lea.sflag [#allocation8], 1
    %22 = vsyncpa %s21, 0
    loop: start=0, step=1, limit=4
    $region2: #{fwd.1} parent=1 // loop_pre_header
      _
    $region3: #{fwd.1} parent=1 // loop_header
      %s24 = sphi 0, %s28
      %p25 = scmp.ge.s32.totalorder %s24, 4
      %s32 = sphi 0, %s32
      %s34 = sphi 0, %s32
      %s35 = sphi 0, %s34
      %s49 = sphi 0, %s35
      %s53 = sphi 0, %s53
      %s55 = sphi 0, %s53
      %s56 = sphi 0, %s55
      %s70 = sphi 0, %s56
      %s74 = sphi 0, %s74
      %s76 = sphi 0, %s74
      %s77 = sphi 0, %s76
      %s91 = sphi 0, %s77
      %s97 = sphi 0, %s99
      %s100 = sphi 0, %s97
      %s101 = sphi 0, %s100
      %s117 = sphi 0, %s101
      %s123 = sphi 0, %s125
      %s126 = sphi 0, %s123
      %s127 = sphi 0, %s126
      %s143 = sphi 0, %s127
      %s149 = sphi 0, %s151
      %s152 = sphi 0, %s149
      %s153 = sphi 0, %s152
      %s169 = sphi 0, %s153
      %s175 = sphi 0, %s177
      %s178 = sphi 0, %s175
      %s179 = sphi 0, %s178
      %s195 = sphi 0, %s179
      %s201 = sphi 0, %s203
      %s204 = sphi 0, %s201
      %s205 = sphi 0, %s204
      %s221 = sphi 0, %s205
      %s227 = sphi 0, %s229
      %s230 = sphi 0, %s227
      %s231 = sphi 0, %s230
      %s247 = sphi 0, %s231
      %s253 = sphi 0, %s255
      %s256 = sphi 0, %s253
      %s257 = sphi 0, %s256
      %s273 = sphi 0, %s257
      %s279 = sphi 0, %s281
      %s282 = sphi 0, %s279
      %s283 = sphi 0, %s282
      %s299 = sphi 0, %s283
      %s305 = sphi 0, %s307
      %s308 = sphi 0, %s305
      %s309 = sphi 0, %s308
      %s325 = sphi 0, %s309
    $region4: #{fwd.1} parent=1 // loop_header_branch
      %27 = sbr.rel (%p25) target = $region8
    $region5: #{fwd.1} parent=1 // loop_body
      %s29 = ssub.s32 %s24, 1
      %s30 = ssub.s32 %s24, 2
      %s31 = sadd.s32 %s24, 1
      %s33 = sadd.s32 %s32, 1
      %p36 = scmp.eq.s32.totalorder %s24, 1
      %p37 = scmp.ne.s32.totalorder %s32, %s34
      %p38 = scmp.eq.s32.totalorder %s24, 0
      %p39 = por %p37, %p38
      %p40 = scmp.ne.s32.totalorder %s32, %s34
      %p41 = scmp.eq.s32.totalorder %s29, 1
      %p42 = por %p40, %p41
      %p43 = scmp.ne.s32.totalorder %s34, %s35
      %p44 = scmp.eq.s32.totalorder %s29, 0
      %p45 = por %p43, %p44
      %p46 = scmp.ne.s32.totalorder %s34, %s35
      %p47 = scmp.eq.s32.totalorder %s30, 1
      %p48 = por %p46, %p47
      %p50 = scmp.ne.s32.totalorder %s35, %s49
      %p51 = scmp.eq.s32.totalorder %s30, 0
      %p52 = por %p50, %p51
      %s54 = sadd.s32 %s53, 1
      %p57 = scmp.eq.s32.totalorder %s24, 1
      %p58 = scmp.ne.s32.totalorder %s53, %s55
      %p59 = scmp.eq.s32.totalorder %s24, 0
      %p60 = por %p58, %p59
      %p61 = scmp.ne.s32.totalorder %s53, %s55
      %p62 = scmp.eq.s32.totalorder %s29, 1
      %p63 = por %p61, %p62
      %p64 = scmp.ne.s32.totalorder %s55, %s56
      %p65 = scmp.eq.s32.totalorder %s29, 0
      %p66 = por %p64, %p65
      %p67 = scmp.ne.s32.totalorder %s55, %s56
      %p68 = scmp.eq.s32.totalorder %s30, 1
      %p69 = por %p67, %p68
      %p71 = scmp.ne.s32.totalorder %s56, %s70
      %p72 = scmp.eq.s32.totalorder %s30, 0
      %p73 = por %p71, %p72
      %s75 = sadd.s32 %s74, 1
      %p78 = scmp.eq.s32.totalorder %s24, 1
      %p79 = scmp.ne.s32.totalorder %s74, %s76
      %p80 = scmp.eq.s32.totalorder %s24, 0
      %p81 = por %p79, %p80
      %p82 = scmp.ne.s32.totalorder %s74, %s76
      %p83 = scmp.eq.s32.totalorder %s29, 1
      %p84 = por %p82, %p83
      %p85 = scmp.ne.s32.totalorder %s76, %s77
      %p86 = scmp.eq.s32.totalorder %s29, 0
      %p87 = por %p85, %p86
      %p88 = scmp.ne.s32.totalorder %s76, %s77
      %p89 = scmp.eq.s32.totalorder %s30, 1
      %p90 = por %p88, %p89
      %p92 = scmp.ne.s32.totalorder %s77, %s91
      %p93 = scmp.eq.s32.totalorder %s30, 0
      %p94 = por %p92, %p93
      %s95 = ssub.s32 %s24, %s31
      %p96 = scmp.eq.s32.totalorder %s95, 0
      %s98 = sadd.s32 %s97, 1
      %s99 = scalar_select %p96, %s97, %s98
      %p102 = pneg %p96
      %p103 = scmp.eq.s32.totalorder %s24, 1
      %p104 = por %p102, %p103
      %p105 = scmp.ne.s32.totalorder %s97, %s100
      %p106 = scmp.eq.s32.totalorder %s24, 0
      %p107 = por %p105, %p106
      %p108 = scmp.ne.s32.totalorder %s97, %s100
      %p109 = scmp.eq.s32.totalorder %s29, 1
      %p110 = por %p108, %p109
      %p111 = scmp.ne.s32.totalorder %s100, %s101
      %p112 = scmp.eq.s32.totalorder %s29, 0
      %p113 = por %p111, %p112
      %p114 = scmp.ne.s32.totalorder %s100, %s101
      %p115 = scmp.eq.s32.totalorder %s30, 1
      %p116 = por %p114, %p115
      %p118 = scmp.ne.s32.totalorder %s101, %s117
      %p119 = scmp.eq.s32.totalorder %s30, 0
      %p120 = por %p118, %p119
      %s121 = ssub.s32 %s24, %s31
      %p122 = scmp.eq.s32.totalorder %s121, 0
      %s124 = sadd.s32 %s123, 1
      %s125 = scalar_select %p122, %s123, %s124
      %p128 = pneg %p122
      %p129 = scmp.eq.s32.totalorder %s24, 1
      %p130 = por %p128, %p129
      %p131 = scmp.ne.s32.totalorder %s123, %s126
      %p132 = scmp.eq.s32.totalorder %s24, 0
      %p133 = por %p131, %p132
      %p134 = scmp.ne.s32.totalorder %s123, %s126
      %p135 = scmp.eq.s32.totalorder %s29, 1
      %p136 = por %p134, %p135
      %p137 = scmp.ne.s32.totalorder %s126, %s127
      %p138 = scmp.eq.s32.totalorder %s29, 0
      %p139 = por %p137, %p138
      %p140 = scmp.ne.s32.totalorder %s126, %s127
      %p141 = scmp.eq.s32.totalorder %s30, 1
      %p142 = por %p140, %p141
      %p144 = scmp.ne.s32.totalorder %s127, %s143
      %p145 = scmp.eq.s32.totalorder %s30, 0
      %p146 = por %p144, %p145
      %s147 = ssub.s32 %s24, %s31
      %p148 = scmp.eq.s32.totalorder %s147, 0
      %s150 = sadd.s32 %s149, 1
      %s151 = scalar_select %p148, %s149, %s150
      %p154 = pneg %p148
      %p155 = scmp.eq.s32.totalorder %s24, 1
      %p156 = por %p154, %p155
      %p157 = scmp.ne.s32.totalorder %s149, %s152
      %p158 = scmp.eq.s32.totalorder %s24, 0
      %p159 = por %p157, %p158
      %p160 = scmp.ne.s32.totalorder %s149, %s152
      %p161 = scmp.eq.s32.totalorder %s29, 1
      %p162 = por %p160, %p161
      %p163 = scmp.ne.s32.totalorder %s152, %s153
      %p164 = scmp.eq.s32.totalorder %s29, 0
      %p165 = por %p163, %p164
      %p166 = scmp.ne.s32.totalorder %s152, %s153
      %p167 = scmp.eq.s32.totalorder %s30, 1
      %p168 = por %p166, %p167
      %p170 = scmp.ne.s32.totalorder %s153, %s169
      %p171 = scmp.eq.s32.totalorder %s30, 0
      %p172 = por %p170, %p171
      %s173 = ssub.s32 %s24, %s31
      %p174 = scmp.eq.s32.totalorder %s173, 0
      %s176 = sadd.s32 %s175, 1
      %s177 = scalar_select %p174, %s175, %s176
      %p180 = pneg %p174
      %p181 = scmp.eq.s32.totalorder %s24, 1
      %p182 = por %p180, %p181
      %p183 = scmp.ne.s32.totalorder %s175, %s178
      %p184 = scmp.eq.s32.totalorder %s24, 0
      %p185 = por %p183, %p184
      %p186 = scmp.ne.s32.totalorder %s175, %s178
      %p187 = scmp.eq.s32.totalorder %s29, 1
      %p188 = por %p186, %p187
      %p189 = scmp.ne.s32.totalorder %s178, %s179
      %p190 = scmp.eq.s32.totalorder %s29, 0
      %p191 = por %p189, %p190
      %p192 = scmp.ne.s32.totalorder %s178, %s179
      %p193 = scmp.eq.s32.totalorder %s30, 1
      %p194 = por %p192, %p193
      %p196 = scmp.ne.s32.totalorder %s179, %s195
      %p197 = scmp.eq.s32.totalorder %s30, 0
      %p198 = por %p196, %p197
      %s199 = ssub.s32 %s24, %s31
      %p200 = scmp.eq.s32.totalorder %s199, 0
      %s202 = sadd.s32 %s201, 1
      %s203 = scalar_select %p200, %s201, %s202
      %p206 = pneg %p200
      %p207 = scmp.eq.s32.totalorder %s24, 1
      %p208 = por %p206, %p207
      %p209 = scmp.ne.s32.totalorder %s201, %s204
      %p210 = scmp.eq.s32.totalorder %s24, 0
      %p211 = por %p209, %p210
      %p212 = scmp.ne.s32.totalorder %s201, %s204
      %p213 = scmp.eq.s32.totalorder %s29, 1
      %p214 = por %p212, %p213
      %p215 = scmp.ne.s32.totalorder %s204, %s205
      %p216 = scmp.eq.s32.totalorder %s29, 0
      %p217 = por %p215, %p216
      %p218 = scmp.ne.s32.totalorder %s204, %s205
      %p219 = scmp.eq.s32.totalorder %s30, 1
      %p220 = por %p218, %p219
      %p222 = scmp.ne.s32.totalorder %s205, %s221
      %p223 = scmp.eq.s32.totalorder %s30, 0
      %p224 = por %p222, %p223
      %s225 = ssub.s32 %s24, %s31
      %p226 = scmp.eq.s32.totalorder %s225, 0
      %s228 = sadd.s32 %s227, 1
      %s229 = scalar_select %p226, %s227, %s228
      %p232 = pneg %p226
      %p233 = scmp.eq.s32.totalorder %s24, 1
      %p234 = por %p232, %p233
      %p235 = scmp.ne.s32.totalorder %s227, %s230
      %p236 = scmp.eq.s32.totalorder %s24, 0
      %p237 = por %p235, %p236
      %p238 = scmp.ne.s32.totalorder %s227, %s230
      %p239 = scmp.eq.s32.totalorder %s29, 1
      %p240 = por %p238, %p239
      %p241 = scmp.ne.s32.totalorder %s230, %s231
      %p242 = scmp.eq.s32.totalorder %s29, 0
      %p243 = por %p241, %p242
      %p244 = scmp.ne.s32.totalorder %s230, %s231
      %p245 = scmp.eq.s32.totalorder %s30, 1
      %p246 = por %p244, %p245
      %p248 = scmp.ne.s32.totalorder %s231, %s247
      %p249 = scmp.eq.s32.totalorder %s30, 0
      %p250 = por %p248, %p249
      %s251 = ssub.s32 %s24, %s31
      %p252 = scmp.eq.s32.totalorder %s251, 0
      %s254 = sadd.s32 %s253, 1
      %s255 = scalar_select %p252, %s253, %s254
      %p258 = pneg %p252
      %p259 = scmp.eq.s32.totalorder %s24, 1
      %p260 = por %p258, %p259
      %p261 = scmp.ne.s32.totalorder %s253, %s256
      %p262 = scmp.eq.s32.totalorder %s24, 0
      %p263 = por %p261, %p262
      %p264 = scmp.ne.s32.totalorder %s253, %s256
      %p265 = scmp.eq.s32.totalorder %s29, 1
      %p266 = por %p264, %p265
      %p267 = scmp.ne.s32.totalorder %s256, %s257
      %p268 = scmp.eq.s32.totalorder %s29, 0
      %p269 = por %p267, %p268
      %p270 = scmp.ne.s32.totalorder %s256, %s257
      %p271 = scmp.eq.s32.totalorder %s30, 1
      %p272 = por %p270, %p271
      %p274 = scmp.ne.s32.totalorder %s257, %s273
      %p275 = scmp.eq.s32.totalorder %s30, 0
      %p276 = por %p274, %p275
      %s277 = ssub.s32 %s24, %s31
      %p278 = scmp.eq.s32.totalorder %s277, 0
      %s280 = sadd.s32 %s279, 1
      %s281 = scalar_select %p278, %s279, %s280
      %p284 = pneg %p278
      %p285 = scmp.eq.s32.totalorder %s24, 1
      %p286 = por %p284, %p285
      %p287 = scmp.ne.s32.totalorder %s279, %s282
      %p288 = scmp.eq.s32.totalorder %s24, 0
      %p289 = por %p287, %p288
      %p290 = scmp.ne.s32.totalorder %s279, %s282
      %p291 = scmp.eq.s32.totalorder %s29, 1
      %p292 = por %p290, %p291
      %p293 = scmp.ne.s32.totalorder %s282, %s283
      %p294 = scmp.eq.s32.totalorder %s29, 0
      %p295 = por %p293, %p294
      %p296 = scmp.ne.s32.totalorder %s282, %s283
      %p297 = scmp.eq.s32.totalorder %s30, 1
      %p298 = por %p296, %p297
      %p300 = scmp.ne.s32.totalorder %s283, %s299
      %p301 = scmp.eq.s32.totalorder %s30, 0
      %p302 = por %p300, %p301
      %s303 = ssub.s32 %s24, %s31
      %p304 = scmp.eq.s32.totalorder %s303, 0
      %s306 = sadd.s32 %s305, 1
      %s307 = scalar_select %p304, %s305, %s306
      %p310 = pneg %p304
      %p311 = scmp.eq.s32.totalorder %s24, 1
      %p312 = por %p310, %p311
      %p313 = scmp.ne.s32.totalorder %s305, %s308
      %p314 = scmp.eq.s32.totalorder %s24, 0
      %p315 = por %p313, %p314
      %p316 = scmp.ne.s32.totalorder %s305, %s308
      %p317 = scmp.eq.s32.totalorder %s29, 1
      %p318 = por %p316, %p317
      %p319 = scmp.ne.s32.totalorder %s308, %s309
      %p320 = scmp.eq.s32.totalorder %s29, 0
      %p321 = por %p319, %p320
      %p322 = scmp.ne.s32.totalorder %s308, %s309
      %p323 = scmp.eq.s32.totalorder %s30, 1
      %p324 = por %p322, %p323
      %p326 = scmp.ne.s32.totalorder %s309, %s325
      %p327 = scmp.eq.s32.totalorder %s30, 0
      %p328 = por %p326, %p327
      %p329 = scmp.le.s32.totalorder 1, %s24
      %p330 = scmp.lt.s32.totalorder %s24, 3
      %p331 = pnand %p329, %p330
      %p332 = pneg %p331
      // Predicated region
      $region9: #{fwd.1} parent=5 // pred_check
        _
      $region10: #{fwd.1} parent=5 // pred_check_branch
        %334 = sbr.rel (%p331) target = $region12
      $region11: #{fwd.1} parent=5 // pred_region
        %s335 = ssub.s32 %s24, 1
        // Predicated region
        $region13: #{fwd.1} parent=11 // pred_check
          %p336 = pneg %p45
        $region14: #{fwd.1} parent=11 // pred_check_branch
          %338 = sbr.rel (%p336) target = $region16
        $region15: #{fwd.1} parent=11 // pred_region
          _
        $region16: #{fwd.1} parent=11 // pred_fallthru
          _
        // Predicated region
        $region17: #{fwd.1} parent=11 // pred_check
          %p339 = pneg %p66
        $region18: #{fwd.1} parent=11 // pred_check_branch
          %341 = sbr.rel (%p339) target = $region20
        $region19: #{fwd.1} parent=11 // pred_region
          _
        $region20: #{fwd.1} parent=11 // pred_fallthru
          _
        // Predicated region
        $region21: #{fwd.1} parent=11 // pred_check
          %p342 = pneg %p87
        $region22: #{fwd.1} parent=11 // pred_check_branch
          %344 = sbr.rel (%p342) target = $region24
        $region23: #{fwd.1} parent=11 // pred_region
          %346 = vsyncadd [#allocation3], 0
          %s347 = sshll.u32 %s2, 4
          %s348 = int_to_ptr.hbm [resolvable:$true] %s347
          %s349 = sshll.u32 [#allocation2], 4
          %s350 = int_to_ptr.vmem [resolvable:$true] %s349
          %355 = dma.hbm_to_vmem [thread:$0]  %s348, 256, %s350, [#allocation3], 128, 128, 8
        $region24: #{fwd.1} parent=11 // pred_fallthru
          _
      $region12: #{fwd.1} parent=5 // pred_fallthru
        _
      %p356 = scmp.lt.s32.totalorder %s24, 2
      // Predicated region
      $region25: #{fwd.1} parent=5 // pred_check
        %p357 = pneg %p356
      $region26: #{fwd.1} parent=5 // pred_check_branch
        %359 = sbr.rel (%p357) target = $region28
      $region27: #{fwd.1} parent=5 // pred_region
        // Predicated region
        $region29: #{fwd.1} parent=27 // pred_check
          %p360 = pneg %p107
        $region30: #{fwd.1} parent=27 // pred_check_branch
          %362 = sbr.rel (%p360) target = $region32
        $region31: #{fwd.1} parent=27 // pred_region
          %p363 = scmp.lt.s32.totalorder %s24, 1
          %s364 = scalar_select %p363, %s24, 1
          %s365 = scalar_lea.vmem %s3, %s364
        $region32: #{fwd.1} parent=27 // pred_fallthru
          _
        // Predicated region
        $region33: #{fwd.1} parent=27 // pred_check
          %p366 = pneg %p133
        $region34: #{fwd.1} parent=27 // pred_check_branch
          %368 = sbr.rel (%p366) target = $region36
        $region35: #{fwd.1} parent=27 // pred_region
          %p369 = scmp.lt.s32.totalorder %s24, 1
          %s370 = scalar_select %p369, %s24, 1
          %s371 = scalar_lea.vmem %s4, %s370
        $region36: #{fwd.1} parent=27 // pred_fallthru
          _
        // Predicated region
        $region37: #{fwd.1} parent=27 // pred_check
          %p372 = pneg %p159
        $region38: #{fwd.1} parent=27 // pred_check_branch
          %374 = sbr.rel (%p372) target = $region40
        $region39: #{fwd.1} parent=27 // pred_region
          %p375 = scmp.lt.s32.totalorder %s24, 1
          %s376 = scalar_select %p375, %s24, 1
          %s377 = scalar_lea.vmem %s5, %s376
        $region40: #{fwd.1} parent=27 // pred_fallthru
          _
        // Predicated region
        $region41: #{fwd.1} parent=27 // pred_check
          %p378 = pneg %p185
        $region42: #{fwd.1} parent=27 // pred_check_branch
          %380 = sbr.rel (%p378) target = $region44
        $region43: #{fwd.1} parent=27 // pred_region
          %s381 = sand.u32 %s24, 1
          %s382 = scalar_lea.sflag [#allocation5], %s381
          %s383 = sand.u32 %s175, 1
          %s384 = smul.addr %s383, 64
          %s385 = scalar_lea.vmem [#allocation4], %s384
          %387 = vsyncadd %s382, 0
          %s388 = smul.addr %s24, 8
          %s389 = smul.addr %s388, 8
          %s390 = scalar_lea.hbm %s6, %s389
          %s391 = sshll.u32 %s390, 4
          %s392 = int_to_ptr.hbm [resolvable:$true] %s391
          %s393 = sshll.u32 %s385, 4
          %s394 = int_to_ptr.vmem [resolvable:$true] %s393
          %399 = dma.hbm_to_vmem [thread:$0]  %s392, 1024, %s394, %s382, 128, 128, 8
        $region44: #{fwd.1} parent=27 // pred_fallthru
          _
        // Predicated region
        $region45: #{fwd.1} parent=27 // pred_check
          %p400 = pneg %p211
        $region46: #{fwd.1} parent=27 // pred_check_branch
          %402 = sbr.rel (%p400) target = $region48
        $region47: #{fwd.1} parent=27 // pred_region
          %p403 = scmp.lt.s32.totalorder %s24, 1
          %s404 = scalar_select %p403, %s24, 1
          %s405 = scalar_lea.vmem %s7, %s404
        $region48: #{fwd.1} parent=27 // pred_fallthru
          _
        // Predicated region
        $region49: #{fwd.1} parent=27 // pred_check
          %p406 = pneg %p237
        $region50: #{fwd.1} parent=27 // pred_check_branch
          %408 = sbr.rel (%p406) target = $region52
        $region51: #{fwd.1} parent=27 // pred_region
          %s409 = sand.u32 %s24, 1
          %s410 = scalar_lea.sflag [#allocation5], %s409
          %s411 = sand.u32 %s227, 1
          %s412 = smul.addr %s411, 64
          %s413 = scalar_lea.vmem [#allocation6], %s412
          %415 = vsyncadd %s410, 0
          %s416 = smul.addr %s24, 8
          %s417 = smul.addr %s416, 8
          %s418 = scalar_lea.hbm %s8, %s417
          %s419 = sshll.u32 %s418, 4
          %s420 = int_to_ptr.hbm [resolvable:$true] %s419
          %s421 = sshll.u32 %s413, 4
          %s422 = int_to_ptr.vmem [resolvable:$true] %s421
          %427 = dma.hbm_to_vmem [thread:$0]  %s420, 1024, %s422, %s410, 128, 128, 8
        $region52: #{fwd.1} parent=27 // pred_fallthru
          _
        // Predicated region
        $region53: #{fwd.1} parent=27 // pred_check
          %p428 = pneg %p263
        $region54: #{fwd.1} parent=27 // pred_check_branch
          %430 = sbr.rel (%p428) target = $region56
        $region55: #{fwd.1} parent=27 // pred_region
          %p431 = scmp.lt.s32.totalorder %s24, 1
          %s432 = scalar_select %p431, %s24, 1
          %s433 = scalar_lea.vmem %s9, %s432
        $region56: #{fwd.1} parent=27 // pred_fallthru
          _
        // Predicated region
        $region57: #{fwd.1} parent=27 // pred_check
          %p434 = pneg %p289
        $region58: #{fwd.1} parent=27 // pred_check_branch
          %436 = sbr.rel (%p434) target = $region60
        $region59: #{fwd.1} parent=27 // pred_region
          %s437 = sand.u32 %s279, 1
          %s438 = scalar_lea.sflag [#allocation8], %s437
          %s439 = sand.u32 %s279, 1
          %s440 = smul.addr %s439, 512
          %s441 = scalar_lea.vmem [#allocation7], %s440
          %443 = vsyncadd %s438, 0
          %s444 = smul.addr %s24, 128
          %s445 = smul.addr %s444, 4
          %s446 = scalar_lea.hbm %s10, %s445
          %s447 = sshll.u32 %s446, 4
          %s448 = int_to_ptr.hbm [resolvable:$true] %s447
          %s449 = sshll.u32 %s441, 4
          %s450 = int_to_ptr.vmem [resolvable:$true] %s449
          %455 = dma.hbm_to_vmem [thread:$0]  %s448, 8192, %s450, %s438, 256, 256, 16
        $region60: #{fwd.1} parent=27 // pred_fallthru
          _
      $region28: #{fwd.1} parent=5 // pred_fallthru
        _
      %p456 = scmp.le.s32.totalorder 1, %s24
      %p457 = scmp.lt.s32.totalorder %s24, 3
      %p458 = pnand %p456, %p457
      %p459 = pneg %p458
      // Predicated region
      $region61: #{fwd.1} parent=5 // pred_check
        _
      $region62: #{fwd.1} parent=5 // pred_check_branch
        %461 = sbr.rel (%p458) target = $region64
      $region63: #{fwd.1} parent=5 // pred_region
        %s462 = ssub.s32 %s24, 1
        // Predicated region
        $region65: #{fwd.1} parent=63 // pred_check
          %p463 = pneg %p87
        $region66: #{fwd.1} parent=63 // pred_check_branch
          %465 = sbr.rel (%p463) target = $region68
        $region67: #{fwd.1} parent=63 // pred_region
          %467 = dma.done [#allocation3], 256
        $region68: #{fwd.1} parent=63 // pred_fallthru
          _
        %s468 = sand.u32 %s29, 1
        %s469 = scalar_lea.sflag [#allocation5], %s468
        %s470 = sand.u32 %s178, 1
        %s471 = smul.addr %s470, 64
        %s472 = scalar_lea.vmem [#allocation4], %s471
        // Predicated region
        $region69: #{fwd.1} parent=63 // pred_check
          %p473 = pneg %p191
        $region70: #{fwd.1} parent=63 // pred_check_branch
          %475 = sbr.rel (%p473) target = $region72
        $region71: #{fwd.1} parent=63 // pred_region
          %477 = dma.done %s469, 1024
        $region72: #{fwd.1} parent=63 // pred_fallthru
          _
        %s478 = sand.u32 %s29, 1
        %s479 = scalar_lea.sflag [#allocation5], %s478
        %s480 = sand.u32 %s230, 1
        %s481 = smul.addr %s480, 64
        %s482 = scalar_lea.vmem [#allocation6], %s481
        // Predicated region
        $region73: #{fwd.1} parent=63 // pred_check
          %p483 = pneg %p243
        $region74: #{fwd.1} parent=63 // pred_check_branch
          %485 = sbr.rel (%p483) target = $region76
        $region75: #{fwd.1} parent=63 // pred_region
          %487 = dma.done %s479, 1024
        $region76: #{fwd.1} parent=63 // pred_fallthru
          _
        %s488 = sand.u32 %s282, 1
        %s489 = scalar_lea.sflag [#allocation8], %s488
        %s490 = sand.u32 %s282, 1
        %s491 = smul.addr %s490, 512
        %s492 = scalar_lea.vmem [#allocation7], %s491
        // Predicated region
        $region77: #{fwd.1} parent=63 // pred_check
          %p493 = pneg %p295
        $region78: #{fwd.1} parent=63 // pred_check_branch
          %495 = sbr.rel (%p493) target = $region80
        $region79: #{fwd.1} parent=63 // pred_region
          %497 = dma.done %s489, 8192
        $region80: #{fwd.1} parent=63 // pred_fallthru
          _
        %p498 = pneg %p45
        %p499 = pneg %p42
        %p500 = pneg %p66
        %p501 = pneg %p63
        %p502 = pneg %p87
        %p503 = pneg %p84
        %p504 = scmp.lt.s32.totalorder %s29, 1
        %s505 = scalar_select %p504, %s29, 1
        %s506 = scalar_lea.vmem %s3, %s505
        %p507 = pneg %p113
        %p508 = pneg %p110
        %p509 = scmp.lt.s32.totalorder %s29, 1
        %s510 = scalar_select %p509, %s29, 1
        %s511 = scalar_lea.vmem %s4, %s510
        %p512 = pneg %p139
        %p513 = pneg %p136
        %p514 = scmp.lt.s32.totalorder %s29, 1
        %s515 = scalar_select %p514, %s29, 1
        %s516 = scalar_lea.vmem %s5, %s515
        %p517 = pneg %p165
        %p518 = pneg %p162
        %s519 = sand.u32 %s29, 1
        %s520 = scalar_lea.sflag [#allocation5], %s519
        %s521 = sand.u32 %s178, 1
        %s522 = smul.addr %s521, 64
        %s523 = scalar_lea.vmem [#allocation4], %s522
        %p524 = pneg %p191
        %p525 = pneg %p188
        %p526 = scmp.lt.s32.totalorder %s29, 1
        %s527 = scalar_select %p526, %s29, 1
        %s528 = scalar_lea.vmem %s7, %s527
        %p529 = pneg %p217
        %p530 = pneg %p214
        %s531 = sand.u32 %s29, 1
        %s532 = scalar_lea.sflag [#allocation5], %s531
        %s533 = sand.u32 %s230, 1
        %s534 = smul.addr %s533, 64
        %s535 = scalar_lea.vmem [#allocation6], %s534
        %p536 = pneg %p243
        %p537 = pneg %p240
        %p538 = scmp.lt.s32.totalorder %s29, 1
        %s539 = scalar_select %p538, %s29, 1
        %s540 = scalar_lea.vmem %s9, %s539
        %p541 = pneg %p269
        %p542 = pneg %p266
        %s543 = sand.u32 %s282, 1
        %s544 = scalar_lea.sflag [#allocation8], %s543
        %s545 = sand.u32 %s282, 1
        %s546 = smul.addr %s545, 512
        %s547 = scalar_lea.vmem [#allocation7], %s546
        %p548 = pneg %p295
        %p549 = pneg %p292
        %p550 = pneg %p321
        %p551 = pneg %p318
        %p552 = scmp.lt.s32.totalorder %s29, 1
        %s553 = scalar_select %p552, %s29, 1
        %s554 = smul.addr %s553, 2
        %s555 = smul.addr %s554, 2
        %s556 = scalar_lea.vmem %s11, %s555
        %p557 = scmp.lt.s32.totalorder %s29, 1
        %s558 = scalar_select %p557, %s29, 1
        %s559 = scalar_lea.vmem %s3, %s558
        %p560 = scmp.lt.s32.totalorder %s29, 1
        %s561 = scalar_select %p560, %s29, 1
        %s562 = scalar_lea.vmem %s4, %s561
        %p563 = scmp.lt.s32.totalorder %s29, 1
        %s564 = scalar_select %p563, %s29, 1
        %s565 = scalar_lea.vmem %s5, %s564
        %p566 = scmp.lt.s32.totalorder %s29, 1
        %s567 = scalar_select %p566, %s29, 1
        %s568 = scalar_lea.vmem %s7, %s567
        %p569 = scmp.lt.s32.totalorder %s29, 1
        %s570 = scalar_select %p569, %s29, 1
        %s571 = scalar_lea.vmem %s9, %s570
        %p572 = scmp.lt.s32.totalorder %s29, 1
        %s573 = scalar_select %p572, %s29, 1
        %s574 = smul.addr %s573, 2
        %s575 = smul.addr %s574, 2
        %s576 = scalar_lea.vmem %s11, %s575
        %v577 = vld [vmem:[%s0] sm:$0xff]
        %v578 = vld [vmem:[%s0 + $0x8] sm:$0xff]
        %v579 = vxor.u32 %v577, 2147483648
        %v580 = vxor.u32 %v578, 2147483648
        %v581 = vmul.f32 %v579, 1.442695
        %v582 = vpow.pop %v581
        %v583 = vmul.f32 %v580, 1.442695
        %v584 = vpow.pop %v583
        %v585 = vadd.f32 %v582, 1.0
        %v586 = vadd.f32 %v584, 1.0
        %v587 = vrcp.pop %v585
        %v588 = vmul.f32 %v585, %v587
        %v589 = vsub.f32 1.0, %v588
        %v590 = vmul.f32 %v587, %v589
        %v591 = vadd.f32 %v587, %v590
        %vm592 = vweird.f32 %v585
        %vm593 = vweird.f32 %v587
        %vm594 = vmor %vm592, %vm593
        %v595 = vsel %vm594, %v587, %v591
        %v596 = vand.u32 2147483647, %v585
        %vm597 = vcmp.eq.f32.partialorder %v596, 8.507059e+37
        %v598 = vand.u32 %v585, 2147483648
        %v599 = vor.u32 1.1754944e-38, %v598
        %v600 = vsel %vm597, %v599, %v595
        %v601 = vmul.f32 1.0, %v600
        %v602 = vrcp.pop %v586
        %v603 = vmul.f32 %v586, %v602
        %v604 = vsub.f32 1.0, %v603
        %v605 = vmul.f32 %v602, %v604
        %v606 = vadd.f32 %v602, %v605
        %vm607 = vweird.f32 %v586
        %vm608 = vweird.f32 %v602
        %vm609 = vmor %vm607, %vm608
        %v610 = vsel %vm609, %v602, %v606
        %v611 = vand.u32 2147483647, %v586
        %vm612 = vcmp.eq.f32.partialorder %v611, 8.507059e+37
        %v613 = vand.u32 %v586, 2147483648
        %v614 = vor.u32 1.1754944e-38, %v613
        %v615 = vsel %vm612, %v614, %v610
        %v616 = vmul.f32 1.0, %v615
        %v617 = vmul.f32 %v601, 0.18
        %v618 = vmul.f32 %v616, 0.18
        %v619 = vadd.f32 %v617, 0.12
        %v620 = vadd.f32 %v618, 0.12
        %v621 = vld [vmem:[%s562] sm:$0x1]
        %623 = vset.pattern.permute.xlu0 0
        %624 = vperm.xlu0 %623, %v619
        %v625 = vpop.permute.xlu0 %624
        %628 = vset.pattern.permute.xlu0 0
        %629 = vperm.xlu0 %628, %v620
        %v630 = vpop.permute.xlu0 %629
        %v633 = vperm.slane %v621, 0
        %v635 = vmul.f32 %v625, %v633
        %v636 = vmul.f32 %v630, %v633
        %v637 = vld [vmem:[%s565] sm:$0x1]
        %v639 = vperm.slane %v637, 0
        %v641 = vadd.f32 %v635, %v639
        %v642 = vadd.f32 %v636, %v639
        %v643 = vtanh.pop %v641
        %v644 = vtanh.pop %v642
        %v645 = vld [vmem:[%s472] sm:$0xff]
        %v646 = vld [vmem:[%s472 + $0x8] sm:$0xff]
        %v647 = vld [vmem:[%s472 + $0x10] sm:$0xff]
        %v648 = vld [vmem:[%s472 + $0x18] sm:$0xff]
        %v649 = vld [vmem:[%s472 + $0x20] sm:$0xff]
        %v650 = vld [vmem:[%s472 + $0x28] sm:$0xff]
        %v651 = vld [vmem:[%s472 + $0x30] sm:$0xff]
        %v652 = vld [vmem:[%s472 + $0x38] sm:$0xff]
        %v653 = vld [vmem:[%s568] sm:$0x1]
        %v655 = vperm.slane %v653, 0
        %vm657 = vcmask 523264
        %v659 = vsel %vm657, %v643, 0
        %v662 = vsel %vm657, %v644, 0
        %664 = vmatpush.msra.mxu0 0.0
        %665 = vmatpush.msra.mxu0 0.0
        %666 = vmatpush.msra.mxu0 0.0
        %667 = vmatpush.msra.mxu0 0.0
        %668 = vmatpush.msra.mxu0 0.0
        %669 = vmatpush.msra.mxu0 0.0
        %670 = vmatpush.msra.mxu0 0.0
        %671 = vmatpush.msra.mxu0 0.0
        %672 = vmatpush.msra.mxu0 %v652
        %673 = vmatpush.msra.mxu0 %v651
        %674 = vmatpush.msra.mxu0 %v650
        %675 = vmatpush.msra.mxu0 %v649
        %676 = vmatpush.msra.mxu0 %v648
        %677 = vmatpush.msra.mxu0 %v647
        %678 = vmatpush.msra.mxu0 %v646
        %679 = vmatpush.msra.mxu0 %v645
        %680 = vmatmul.f32.gmra.mxu0 %v659
        %v681 = vpop.f32.mrf.mxu0
        %v682 = vadd.f32 %v655, %v681
        %683 = vmatmul.f32.gmra.mxu0 %v662
        %v684 = vpop.f32.mrf.mxu0
        %v685 = vadd.f32 %v655, %v684
        %686 = vdwg.mxu0
        %v687 = vtanh.pop %v682
        %v688 = vtanh.pop %v685
        %v689 = vld [vmem:[%s482] sm:$0xff]
        %v690 = vld [vmem:[%s482 + $0x8] sm:$0xff]
        %v691 = vld [vmem:[%s482 + $0x10] sm:$0xff]
        %v692 = vld [vmem:[%s482 + $0x18] sm:$0xff]
        %v693 = vld [vmem:[%s482 + $0x20] sm:$0xff]
        %v694 = vld [vmem:[%s482 + $0x28] sm:$0xff]
        %v695 = vld [vmem:[%s482 + $0x30] sm:$0xff]
        %v696 = vld [vmem:[%s482 + $0x38] sm:$0xff]
        %v697 = vld [vmem:[%s571] sm:$0x1]
        %v699 = vperm.slane %v697, 0
        %v702 = vsel %vm657, %v687, 0
        %v705 = vsel %vm657, %v688, 0
        %707 = vmatpush.msra.mxu0 0.0
        %708 = vmatpush.msra.mxu0 0.0
        %709 = vmatpush.msra.mxu0 0.0
        %710 = vmatpush.msra.mxu0 0.0
        %711 = vmatpush.msra.mxu0 0.0
        %712 = vmatpush.msra.mxu0 0.0
        %713 = vmatpush.msra.mxu0 0.0
        %714 = vmatpush.msra.mxu0 0.0
        %715 = vmatpush.msra.mxu0 %v696
        %716 = vmatpush.msra.mxu0 %v695
        %717 = vmatpush.msra.mxu0 %v694
        %718 = vmatpush.msra.mxu0 %v693
        %719 = vmatpush.msra.mxu0 %v692
        %720 = vmatpush.msra.mxu0 %v691
        %721 = vmatpush.msra.mxu0 %v690
        %722 = vmatpush.msra.mxu0 %v689
        %723 = vmatmul.f32.gmra.mxu0 %v702
        %v724 = vpop.f32.mrf.mxu0
        %v725 = vadd.f32 %v699, %v724
        %726 = vmatmul.f32.gmra.mxu0 %v705
        %v727 = vpop.f32.mrf.mxu0
        %v728 = vadd.f32 %v699, %v727
        %729 = vdwg.mxu0
        %v730 = vxor.u32 %v725, 2147483648
        %v731 = vxor.u32 %v728, 2147483648
        %v732 = vmul.f32 %v730, 1.442695
        %v733 = vpow.pop %v732
        %v734 = vmul.f32 %v731, 1.442695
        %v735 = vpow.pop %v734
        %v736 = vadd.f32 %v733, 1.0
        %v737 = vadd.f32 %v735, 1.0
        %v738 = vrcp.pop %v736
        %v739 = vmul.f32 %v736, %v738
        %v740 = vsub.f32 1.0, %v739
        %v741 = vmul.f32 %v738, %v740
        %v742 = vadd.f32 %v738, %v741
        %vm743 = vweird.f32 %v736
        %vm744 = vweird.f32 %v738
        %vm745 = vmor %vm743, %vm744
        %v746 = vsel %vm745, %v738, %v742
        %v747 = vand.u32 2147483647, %v736
        %vm748 = vcmp.eq.f32.partialorder %v747, 8.507059e+37
        %v749 = vand.u32 %v736, 2147483648
        %v750 = vor.u32 1.1754944e-38, %v749
        %v751 = vsel %vm748, %v750, %v746
        %v752 = vmul.f32 1.0, %v751
        %v753 = vrcp.pop %v737
        %v754 = vmul.f32 %v737, %v753
        %v755 = vsub.f32 1.0, %v754
        %v756 = vmul.f32 %v753, %v755
        %v757 = vadd.f32 %v753, %v756
        %vm758 = vweird.f32 %v737
        %vm759 = vweird.f32 %v753
        %vm760 = vmor %vm758, %vm759
        %v761 = vsel %vm760, %v753, %v757
        %v762 = vand.u32 2147483647, %v737
        %vm763 = vcmp.eq.f32.partialorder %v762, 8.507059e+37
        %v764 = vand.u32 %v737, 2147483648
        %v765 = vor.u32 1.1754944e-38, %v764
        %v766 = vsel %vm763, %v765, %v761
        %v767 = vmul.f32 1.0, %v766
        %v768 = vadd.f32 %v752, 1.0
        %v769 = vadd.f32 %v767, 1.0
        %v770 = vld [vmem:[%s1] sm:$0xff]
        %v771 = vld [vmem:[%s1 + $0x8] sm:$0xff]
        %v772 = vmul.f32 %v725, %v770
        %v773 = vmul.f32 %v728, %v771
        %vm774 = vcmask 654336
        %v775 = vsel %vm774, %v772, 0.0
        %776 = vadd.xlane.f32.xlu0 %v775
        %v777 = vpop.xlane.xlu0 %776
        %v778 = vsel %vm774, %v773, 0.0
        %779 = vadd.xlane.f32.xlu0 %v778
        %v780 = vpop.xlane.xlu0 %779
        %v781 = vld [vmem:[#allocation2] sm:$0xff]
        %v782 = vld [vmem:[#allocation2 + $0x8] sm:$0xff]
        %v783 = vmul.f32 %v725, %v781
        %v784 = vmul.f32 %v728, %v782
        %v785 = vsel %vm774, %v783, 0.0
        %786 = vadd.xlane.f32.xlu0 %v785
        %v787 = vpop.xlane.xlu0 %786
        %v788 = vsel %vm774, %v784, 0.0
        %789 = vadd.xlane.f32.xlu0 %v788
        %v790 = vpop.xlane.xlu0 %789
        %v791 = vld [vmem:[%s559] sm:$0x1]
        %v793 = vperm.slane %v791, 0
        %794 = vrot.lane.b32.xlu0 %v793, 80
        %v795 = vpop.permute.xlu0 %794
        %v797 = vmul.f32 %v768, %v795
        %v798 = vmul.f32 %v769, %v795
        %v799 = vand.u32 2147483647, %v797
        %vm800 = vcmp.le.f32.partialorder %v799, 0.7853982
        %vm801 = vcmp.lt.s32.totalorder %v797, 0
        %v802 = vand.u32 %v797, 2139095040
        %v803 = vshrl.u32 %v802, 23
        %v804 = vsub.s32 %v803, 127
        %v805 = vand.u32 2147483647, %v797
        %v806 = vand.u32 %v805, 8388607
        %v807 = vor.u32 %v806, 8388608
        %v808 = vsub.s32 0, %v807
        %v809 = vadd.s32 %v804, 1
        %vm810 = vcmp.gt.s32.totalorder %v809, 0
        %v811 = vsel %vm810, %v809, 0
        %v812 = vshrl.u32 %v811, 5
        %v813 = vand.u32 %v811, 31
        %v814 = vsub.s32 32, %v813
        %v815 = vshrl.u32 683565275, %v814
        %v816 = vshll.u32 683565275, %v813
        %v817 = vshrl.u32 2475754826, %v814
        %v818 = vor.u32 %v816, %v817
        %v819 = vshll.u32 2475754826, %v813
        %v820 = vshrl.u32 2131351028, %v814
        %v821 = vor.u32 %v819, %v820
        %v822 = vshll.u32 2131351028, %v813
        %v823 = vshrl.u32 2102212464, %v814
        %v824 = vor.u32 %v822, %v823
        %v825 = vshll.u32 2102212464, %v813
        %v826 = vshrl.u32 920167782, %v814
        %v827 = vor.u32 %v825, %v826
        %v828 = vshll.u32 920167782, %v813
        %v829 = vshrl.u32 1326507024, %v814
        %v830 = vor.u32 %v828, %v829
        %vm831 = vcmp.lt.s32.totalorder %v812, 1
        %vm832 = vcmp.lt.s32.totalorder %v812, 2
        %vm833 = vcmp.lt.s32.totalorder %v812, 3
        %vm834 = vcmp.lt.s32.totalorder %v812, 4
        %v835 = vsel %vm831, %v815, %v818
        %v836 = vsel %vm834, %v824, 2102212464
        %v837 = vsel %vm833, %v821, %v836
        %v838 = vsel %vm832, %v835, %v837
        %v839 = vsel %vm831, %v818, %v821
        %v840 = vsel %vm834, %v827, 920167782
        %v841 = vsel %vm833, %v824, %v840
        %v842 = vsel %vm832, %v839, %v841
        %v843 = vsel %vm831, %v821, %v824
        %v844 = vsel %vm834, %v830, 1326507024
        %v845 = vsel %vm833, %v827, %v844
        %v846 = vsel %vm832, %v843, %v845
        %v847 = vshll.u32 %v807, 8
        %v848 = vand.u32 %v847, 65535
        %v849 = vshrl.u32 %v847, 16
        %v850 = vand.u32 %v846, 65535
        %v851 = vshrl.u32 %v846, 16
        %v852 = vmul.u32 %v848, %v850
        %v853 = vmul.u32 %v848, %v851
        %v854 = vmul.u32 %v849, %v850
        %v855 = vmul.u32 %v849, %v851
        %v856 = vshll.u32 %v853, 16
        %v857 = vshrl.u32 %v853, 16
        %v858 = vshll.u32 %v854, 16
        %v859 = vshrl.u32 %v854, 16
        %vm860 = vc.u32 %v852, %v856
        %v861 = vsel %vm860, 1, 0
        %v862 = vadd.s32 %v852, %v856
        %v863 = vadd.s32 %v855, %v861
        %vm864 = vc.u32 %v862, %v858
        %v865 = vsel %vm864, 1, 0
        %v866 = vadd.s32 %v862, %v858
        %v867 = vadd.s32 %v863, %v865
        %v868 = vadd.s32 %v867, %v857
        %v869 = vadd.s32 %v868, %v859
        %v870 = vand.u32 %v847, 65535
        %v871 = vshrl.u32 %v847, 16
        %v872 = vand.u32 %v842, 65535
        %v873 = vshrl.u32 %v842, 16
        %v874 = vmul.u32 %v870, %v872
        %v875 = vmul.u32 %v870, %v873
        %v876 = vmul.u32 %v871, %v872
        %v877 = vmul.u32 %v871, %v873
        %v878 = vshll.u32 %v875, 16
        %v879 = vshrl.u32 %v875, 16
        %v880 = vshll.u32 %v876, 16
        %v881 = vshrl.u32 %v876, 16
        %vm882 = vc.u32 %v874, %v878
        %v883 = vsel %vm882, 1, 0
        %v884 = vadd.s32 %v874, %v878
        %v885 = vadd.s32 %v877, %v883
        %vm886 = vc.u32 %v884, %v880
        %v887 = vsel %vm886, 1, 0
        %v888 = vadd.s32 %v884, %v880
        %v889 = vadd.s32 %v885, %v887
        %v890 = vadd.s32 %v889, %v879
        %v891 = vadd.s32 %v890, %v881
        %v892 = vmul.u32 %v847, %v838
        %v893 = vadd.s32 %v869, %v888
        %vm894 = vc.u32 %v869, %v888
        %v895 = vadd.s32 %v891, 1
        %v896 = vsel %vm894, %v895, %v891
        %v897 = vadd.s32 %v892, %v896
        %v898 = vadd.s32 %v897, 536870912
        %v899 = vshrl.u32 %v898, 30
        %v900 = vshll.u32 %v899, 30
        %v901 = vsub.s32 %v897, %v900
        %vm902 = vcmp.lt.s32.totalorder %v901, 0
        %v903 = vsub.s32 0, %v901
        %v904 = vsel %vm902, %v903, %v901
        %v905 = vclz %v904
        %v906 = vsub.s32 %v905, 2
        %vm907 = vcmp.gt.s32.totalorder 0, %v906
        %v908 = vsel %vm907, 0, %v906
        %v909 = vsub.s32 32, %v908
        %v910 = vshll.u32 %v901, %v908
        %v911 = vshrl.u32 %v893, %v909
        %v912 = vor.u32 %v910, %v911
        %v913 = vsub.s32 4294967266, %v908
        %v914 = vadd.s32 %v913, 127
        %v915 = vshll.u32 %v914, 23
        %v916 = vor.u32 4788187, %v915
        %v917 = vand.u32 2147483647, %v916
        %v919 = vcvt.s32.f32 %v912
        %v920 = vmul.f32 %v919, %v917
        %v921 = vxor.u32 %v920, 2147483648
        %v922 = vsel %vm801, %v921, %v920
        %v923 = vsub.s32 4, %v899
        %v924 = vsel %vm801, %v923, %v899
        %v925 = vsel %vm800, %v797, %v922
        %v926 = vsel %vm800, 0, %v924
        %v927 = vmul.f32 %v925, %v925
        %v928 = vmul.f32 %v927, -0.001358992
        %v929 = vadd.f32 %v928, 0.041655596
        %v930 = vmul.f32 %v927, %v929
        %v931 = vadd.f32 %v930, -0.4999988
        %v932 = vmul.f32 %v927, %v931
        %v933 = vadd.f32 1.0, %v932
        %v934 = vmul.f32 %v925, %v925
        %v935 = vmul.f32 %v934, -0.00019511016
        %v936 = vadd.f32 %v935, 0.008332121
        %v937 = vmul.f32 %v934, %v936
        %v938 = vadd.f32 %v937, -0.16666654
        %v939 = vmul.f32 %v934, %v938
        %v940 = vadd.f32 %v939, 1.0
        %v941 = vmul.f32 %v940, %v925
        %vm942 = vweird.f32 %v797
        %v943 = vand.u32 %v926, 3
        %vm944 = vcmp.lt.s32.totalorder %v943, 2
        %vm945 = vcmp.eq.s32.totalorder %v943, 0
        %v946 = vxor.u32 %v941, 2147483648
        %v947 = vsel %vm945, %v933, %v946
        %vm948 = vcmp.eq.s32.totalorder %v943, 2
        %v949 = vxor.u32 %v933, 2147483648
        %v950 = vsel %vm948, %v949, %v941
        %v951 = vsel %vm944, %v947, %v950
        %v952 = vsel %vm942, nan, %v951
        %v953 = vand.u32 2147483647, %v798
        %vm954 = vcmp.le.f32.partialorder %v953, 0.7853982
        %vm955 = vcmp.lt.s32.totalorder %v798, 0
        %v956 = vand.u32 %v798, 2139095040
        %v957 = vshrl.u32 %v956, 23
        %v958 = vsub.s32 %v957, 127
        %v959 = vand.u32 2147483647, %v798
        %v960 = vand.u32 %v959, 8388607
        %v961 = vor.u32 %v960, 8388608
        %v962 = vsub.s32 0, %v961
        %v963 = vadd.s32 %v958, 1
        %vm964 = vcmp.gt.s32.totalorder %v963, 0
        %v965 = vsel %vm964, %v963, 0
        %v966 = vshrl.u32 %v965, 5
        %v967 = vand.u32 %v965, 31
        %v968 = vsub.s32 32, %v967
        %v969 = vshrl.u32 683565275, %v968
        %v970 = vshll.u32 683565275, %v967
        %v971 = vshrl.u32 2475754826, %v968
        %v972 = vor.u32 %v970, %v971
        %v973 = vshll.u32 2475754826, %v967
        %v974 = vshrl.u32 2131351028, %v968
        %v975 = vor.u32 %v973, %v974
        %v976 = vshll.u32 2131351028, %v967
        %v977 = vshrl.u32 2102212464, %v968
        %v978 = vor.u32 %v976, %v977
        %v979 = vshll.u32 2102212464, %v967
        %v980 = vshrl.u32 920167782, %v968
        %v981 = vor.u32 %v979, %v980
        %v982 = vshll.u32 920167782, %v967
        %v983 = vshrl.u32 1326507024, %v968
        %v984 = vor.u32 %v982, %v983
        %vm985 = vcmp.lt.s32.totalorder %v966, 1
        %vm986 = vcmp.lt.s32.totalorder %v966, 2
        %vm987 = vcmp.lt.s32.totalorder %v966, 3
        %vm988 = vcmp.lt.s32.totalorder %v966, 4
        %v989 = vsel %vm985, %v969, %v972
        %v990 = vsel %vm988, %v978, 2102212464
        %v991 = vsel %vm987, %v975, %v990
        %v992 = vsel %vm986, %v989, %v991
        %v993 = vsel %vm985, %v972, %v975
        %v994 = vsel %vm988, %v981, 920167782
        %v995 = vsel %vm987, %v978, %v994
        %v996 = vsel %vm986, %v993, %v995
        %v997 = vsel %vm985, %v975, %v978
        %v998 = vsel %vm988, %v984, 1326507024
        %v999 = vsel %vm987, %v981, %v998
        %v1000 = vsel %vm986, %v997, %v999
        %v1001 = vshll.u32 %v961, 8
        %v1002 = vand.u32 %v1001, 65535
        %v1003 = vshrl.u32 %v1001, 16
        %v1004 = vand.u32 %v1000, 65535
        %v1005 = vshrl.u32 %v1000, 16
        %v1006 = vmul.u32 %v1002, %v1004
        %v1007 = vmul.u32 %v1002, %v1005
        %v1008 = vmul.u32 %v1003, %v1004
        %v1009 = vmul.u32 %v1003, %v1005
        %v1010 = vshll.u32 %v1007, 16
        %v1011 = vshrl.u32 %v1007, 16
        %v1012 = vshll.u32 %v1008, 16
        %v1013 = vshrl.u32 %v1008, 16
        %vm1014 = vc.u32 %v1006, %v1010
        %v1015 = vsel %vm1014, 1, 0
        %v1016 = vadd.s32 %v1006, %v1010
        %v1017 = vadd.s32 %v1009, %v1015
        %vm1018 = vc.u32 %v1016, %v1012
        %v1019 = vsel %vm1018, 1, 0
        %v1020 = vadd.s32 %v1016, %v1012
        %v1021 = vadd.s32 %v1017, %v1019
        %v1022 = vadd.s32 %v1021, %v1011
        %v1023 = vadd.s32 %v1022, %v1013
        %v1024 = vand.u32 %v1001, 65535
        %v1025 = vshrl.u32 %v1001, 16
        %v1026 = vand.u32 %v996, 65535
        %v1027 = vshrl.u32 %v996, 16
        %v1028 = vmul.u32 %v1024, %v1026
        %v1029 = vmul.u32 %v1024, %v1027
        %v1030 = vmul.u32 %v1025, %v1026
        %v1031 = vmul.u32 %v1025, %v1027
        %v1032 = vshll.u32 %v1029, 16
        %v1033 = vshrl.u32 %v1029, 16
        %v1034 = vshll.u32 %v1030, 16
        %v1035 = vshrl.u32 %v1030, 16
        %vm1036 = vc.u32 %v1028, %v1032
        %v1037 = vsel %vm1036, 1, 0
        %v1038 = vadd.s32 %v1028, %v1032
        %v1039 = vadd.s32 %v1031, %v1037
        %vm1040 = vc.u32 %v1038, %v1034
        %v1041 = vsel %vm1040, 1, 0
        %v1042 = vadd.s32 %v1038, %v1034
        %v1043 = vadd.s32 %v1039, %v1041
        %v1044 = vadd.s32 %v1043, %v1033
        %v1045 = vadd.s32 %v1044, %v1035
        %v1046 = vmul.u32 %v1001, %v992
        %v1047 = vadd.s32 %v1023, %v1042
        %vm1048 = vc.u32 %v1023, %v1042
        %v1049 = vadd.s32 %v1045, 1
        %v1050 = vsel %vm1048, %v1049, %v1045
        %v1051 = vadd.s32 %v1046, %v1050
        %v1052 = vadd.s32 %v1051, 536870912
        %v1053 = vshrl.u32 %v1052, 30
        %v1054 = vshll.u32 %v1053, 30
        %v1055 = vsub.s32 %v1051, %v1054
        %vm1056 = vcmp.lt.s32.totalorder %v1055, 0
        %v1057 = vsub.s32 0, %v1055
        %v1058 = vsel %vm1056, %v1057, %v1055
        %v1059 = vclz %v1058
        %v1060 = vsub.s32 %v1059, 2
        %vm1061 = vcmp.gt.s32.totalorder 0, %v1060
        %v1062 = vsel %vm1061, 0, %v1060
        %v1063 = vsub.s32 32, %v1062
        %v1064 = vshll.u32 %v1055, %v1062
        %v1065 = vshrl.u32 %v1047, %v1063
        %v1066 = vor.u32 %v1064, %v1065
        %v1067 = vsub.s32 4294967266, %v1062
        %v1068 = vadd.s32 %v1067, 127
        %v1069 = vshll.u32 %v1068, 23
        %v1070 = vor.u32 4788187, %v1069
        %v1071 = vand.u32 2147483647, %v1070
        %v1073 = vcvt.s32.f32 %v1066
        %v1074 = vmul.f32 %v1073, %v1071
        %v1075 = vxor.u32 %v1074, 2147483648
        %v1076 = vsel %vm955, %v1075, %v1074
        %v1077 = vsub.s32 4, %v1053
        %v1078 = vsel %vm955, %v1077, %v1053
        %v1079 = vsel %vm954, %v798, %v1076
        %v1080 = vsel %vm954, 0, %v1078
        %v1081 = vmul.f32 %v1079, %v1079
        %v1082 = vmul.f32 %v1081, -0.001358992
        %v1083 = vadd.f32 %v1082, 0.041655596
        %v1084 = vmul.f32 %v1081, %v1083
        %v1085 = vadd.f32 %v1084, -0.4999988
        %v1086 = vmul.f32 %v1081, %v1085
        %v1087 = vadd.f32 1.0, %v1086
        %v1088 = vmul.f32 %v1079, %v1079
        %v1089 = vmul.f32 %v1088, -0.00019511016
        %v1090 = vadd.f32 %v1089, 0.008332121
        %v1091 = vmul.f32 %v1088, %v1090
        %v1092 = vadd.f32 %v1091, -0.16666654
        %v1093 = vmul.f32 %v1088, %v1092
        %v1094 = vadd.f32 %v1093, 1.0
        %v1095 = vmul.f32 %v1094, %v1079
        %vm1096 = vweird.f32 %v798
        %v1097 = vand.u32 %v1080, 3
        %vm1098 = vcmp.lt.s32.totalorder %v1097, 2
        %vm1099 = vcmp.eq.s32.totalorder %v1097, 0
        %v1100 = vxor.u32 %v1095, 2147483648
        %v1101 = vsel %vm1099, %v1087, %v1100
        %vm1102 = vcmp.eq.s32.totalorder %v1097, 2
        %v1103 = vxor.u32 %v1087, 2147483648
        %v1104 = vsel %vm1102, %v1103, %v1095
        %v1105 = vsel %vm1098, %v1101, %v1104
        %v1106 = vsel %vm1096, nan, %v1105
        %v1107 = vand.u32 2147483647, %v797
        %vm1108 = vcmp.le.f32.partialorder %v1107, 0.7853982
        %vm1109 = vcmp.lt.s32.totalorder %v797, 0
        %v1110 = vand.u32 %v797, 2139095040
        %v1111 = vshrl.u32 %v1110, 23
        %v1112 = vsub.s32 %v1111, 127
        %v1113 = vand.u32 2147483647, %v797
        %v1114 = vand.u32 %v1113, 8388607
        %v1115 = vor.u32 %v1114, 8388608
        %v1116 = vsub.s32 0, %v1115
        %v1117 = vadd.s32 %v1112, 1
        %vm1118 = vcmp.gt.s32.totalorder %v1117, 0
        %v1119 = vsel %vm1118, %v1117, 0
        %v1120 = vshrl.u32 %v1119, 5
        %v1121 = vand.u32 %v1119, 31
        %v1122 = vsub.s32 32, %v1121
        %v1123 = vshrl.u32 683565275, %v1122
        %v1124 = vshll.u32 683565275, %v1121
        %v1125 = vshrl.u32 2475754826, %v1122
        %v1126 = vor.u32 %v1124, %v1125
        %v1127 = vshll.u32 2475754826, %v1121
        %v1128 = vshrl.u32 2131351028, %v1122
        %v1129 = vor.u32 %v1127, %v1128
        %v1130 = vshll.u32 2131351028, %v1121
        %v1131 = vshrl.u32 2102212464, %v1122
        %v1132 = vor.u32 %v1130, %v1131
        %v1133 = vshll.u32 2102212464, %v1121
        %v1134 = vshrl.u32 920167782, %v1122
        %v1135 = vor.u32 %v1133, %v1134
        %v1136 = vshll.u32 920167782, %v1121
        %v1137 = vshrl.u32 1326507024, %v1122
        %v1138 = vor.u32 %v1136, %v1137
        %vm1139 = vcmp.lt.s32.totalorder %v1120, 1
        %vm1140 = vcmp.lt.s32.totalorder %v1120, 2
        %vm1141 = vcmp.lt.s32.totalorder %v1120, 3
        %vm1142 = vcmp.lt.s32.totalorder %v1120, 4
        %v1143 = vsel %vm1139, %v1123, %v1126
        %v1144 = vsel %vm1142, %v1132, 2102212464
        %v1145 = vsel %vm1141, %v1129, %v1144
        %v1146 = vsel %vm1140, %v1143, %v1145
        %v1147 = vsel %vm1139, %v1126, %v1129
        %v1148 = vsel %vm1142, %v1135, 920167782
        %v1149 = vsel %vm1141, %v1132, %v1148
        %v1150 = vsel %vm1140, %v1147, %v1149
        %v1151 = vsel %vm1139, %v1129, %v1132
        %v1152 = vsel %vm1142, %v1138, 1326507024
        %v1153 = vsel %vm1141, %v1135, %v1152
        %v1154 = vsel %vm1140, %v1151, %v1153
        %v1155 = vshll.u32 %v1115, 8
        %v1156 = vand.u32 %v1155, 65535
        %v1157 = vshrl.u32 %v1155, 16
        %v1158 = vand.u32 %v1154, 65535
        %v1159 = vshrl.u32 %v1154, 16
        %v1160 = vmul.u32 %v1156, %v1158
        %v1161 = vmul.u32 %v1156, %v1159
        %v1162 = vmul.u32 %v1157, %v1158
        %v1163 = vmul.u32 %v1157, %v1159
        %v1164 = vshll.u32 %v1161, 16
        %v1165 = vshrl.u32 %v1161, 16
        %v1166 = vshll.u32 %v1162, 16
        %v1167 = vshrl.u32 %v1162, 16
        %vm1168 = vc.u32 %v1160, %v1164
        %v1169 = vsel %vm1168, 1, 0
        %v1170 = vadd.s32 %v1160, %v1164
        %v1171 = vadd.s32 %v1163, %v1169
        %vm1172 = vc.u32 %v1170, %v1166
        %v1173 = vsel %vm1172, 1, 0
        %v1174 = vadd.s32 %v1170, %v1166
        %v1175 = vadd.s32 %v1171, %v1173
        %v1176 = vadd.s32 %v1175, %v1165
        %v1177 = vadd.s32 %v1176, %v1167
        %v1178 = vand.u32 %v1155, 65535
        %v1179 = vshrl.u32 %v1155, 16
        %v1180 = vand.u32 %v1150, 65535
        %v1181 = vshrl.u32 %v1150, 16
        %v1182 = vmul.u32 %v1178, %v1180
        %v1183 = vmul.u32 %v1178, %v1181
        %v1184 = vmul.u32 %v1179, %v1180
        %v1185 = vmul.u32 %v1179, %v1181
        %v1186 = vshll.u32 %v1183, 16
        %v1187 = vshrl.u32 %v1183, 16
        %v1188 = vshll.u32 %v1184, 16
        %v1189 = vshrl.u32 %v1184, 16
        %vm1190 = vc.u32 %v1182, %v1186
        %v1191 = vsel %vm1190, 1, 0
        %v1192 = vadd.s32 %v1182, %v1186
        %v1193 = vadd.s32 %v1185, %v1191
        %vm1194 = vc.u32 %v1192, %v1188
        %v1195 = vsel %vm1194, 1, 0
        %v1196 = vadd.s32 %v1192, %v1188
        %v1197 = vadd.s32 %v1193, %v1195
        %v1198 = vadd.s32 %v1197, %v1187
        %v1199 = vadd.s32 %v1198, %v1189
        %v1200 = vmul.u32 %v1155, %v1146
        %v1201 = vadd.s32 %v1177, %v1196
        %vm1202 = vc.u32 %v1177, %v1196
        %v1203 = vadd.s32 %v1199, 1
        %v1204 = vsel %vm1202, %v1203, %v1199
        %v1205 = vadd.s32 %v1200, %v1204
        %v1206 = vadd.s32 %v1205, 536870912
        %v1207 = vshrl.u32 %v1206, 30
        %v1208 = vshll.u32 %v1207, 30
        %v1209 = vsub.s32 %v1205, %v1208
        %vm1210 = vcmp.lt.s32.totalorder %v1209, 0
        %v1211 = vsub.s32 0, %v1209
        %v1212 = vsel %vm1210, %v1211, %v1209
        %v1213 = vclz %v1212
        %v1214 = vsub.s32 %v1213, 2
        %vm1215 = vcmp.gt.s32.totalorder 0, %v1214
        %v1216 = vsel %vm1215, 0, %v1214
        %v1217 = vsub.s32 32, %v1216
        %v1218 = vshll.u32 %v1209, %v1216
        %v1219 = vshrl.u32 %v1201, %v1217
        %v1220 = vor.u32 %v1218, %v1219
        %v1221 = vsub.s32 4294967266, %v1216
        %v1222 = vadd.s32 %v1221, 127
        %v1223 = vshll.u32 %v1222, 23
        %v1224 = vor.u32 4788187, %v1223
        %v1225 = vand.u32 2147483647, %v1224
        %v1227 = vcvt.s32.f32 %v1220
        %v1228 = vmul.f32 %v1227, %v1225
        %v1229 = vxor.u32 %v1228, 2147483648
        %v1230 = vsel %vm1109, %v1229, %v1228
        %v1231 = vsub.s32 4, %v1207
        %v1232 = vsel %vm1109, %v1231, %v1207
        %v1233 = vsel %vm1108, %v797, %v1230
        %v1234 = vsel %vm1108, 0, %v1232
        %v1235 = vmul.f32 %v1233, %v1233
        %v1236 = vmul.f32 %v1235, -0.001358992
        %v1237 = vadd.f32 %v1236, 0.041655596
        %v1238 = vmul.f32 %v1235, %v1237
        %v1239 = vadd.f32 %v1238, -0.4999988
        %v1240 = vmul.f32 %v1235, %v1239
        %v1241 = vadd.f32 1.0, %v1240
        %v1242 = vmul.f32 %v1233, %v1233
        %v1243 = vmul.f32 %v1242, -0.00019511016
        %v1244 = vadd.f32 %v1243, 0.008332121
        %v1245 = vmul.f32 %v1242, %v1244
        %v1246 = vadd.f32 %v1245, -0.16666654
        %v1247 = vmul.f32 %v1242, %v1246
        %v1248 = vadd.f32 %v1247, 1.0
        %v1249 = vmul.f32 %v1248, %v1233
        %vm1250 = vweird.f32 %v797
        %v1251 = vadd.s32 %v1234, 3
        %v1252 = vand.u32 %v1251, 3
        %vm1253 = vcmp.lt.s32.totalorder %v1252, 2
        %vm1254 = vcmp.eq.s32.totalorder %v1252, 0
        %v1255 = vxor.u32 %v1249, 2147483648
        %v1256 = vsel %vm1254, %v1241, %v1255
        %vm1257 = vcmp.eq.s32.totalorder %v1252, 2
        %v1258 = vxor.u32 %v1241, 2147483648
        %v1259 = vsel %vm1257, %v1258, %v1249
        %v1260 = vsel %vm1253, %v1256, %v1259
        %v1261 = vsel %vm1250, nan, %v1260
        %v1262 = vand.u32 2147483647, %v798
        %vm1263 = vcmp.le.f32.partialorder %v1262, 0.7853982
        %vm1264 = vcmp.lt.s32.totalorder %v798, 0
        %v1265 = vand.u32 %v798, 2139095040
        %v1266 = vshrl.u32 %v1265, 23
        %v1267 = vsub.s32 %v1266, 127
        %v1268 = vand.u32 2147483647, %v798
        %v1269 = vand.u32 %v1268, 8388607
        %v1270 = vor.u32 %v1269, 8388608
        %v1271 = vsub.s32 0, %v1270
        %v1272 = vadd.s32 %v1267, 1
        %vm1273 = vcmp.gt.s32.totalorder %v1272, 0
        %v1274 = vsel %vm1273, %v1272, 0
        %v1275 = vshrl.u32 %v1274, 5
        %v1276 = vand.u32 %v1274, 31
        %v1277 = vsub.s32 32, %v1276
        %v1278 = vshrl.u32 683565275, %v1277
        %v1279 = vshll.u32 683565275, %v1276
        %v1280 = vshrl.u32 2475754826, %v1277
        %v1281 = vor.u32 %v1279, %v1280
        %v1282 = vshll.u32 2475754826, %v1276
        %v1283 = vshrl.u32 2131351028, %v1277
        %v1284 = vor.u32 %v1282, %v1283
        %v1285 = vshll.u32 2131351028, %v1276
        %v1286 = vshrl.u32 2102212464, %v1277
        %v1287 = vor.u32 %v1285, %v1286
        %v1288 = vshll.u32 2102212464, %v1276
        %v1289 = vshrl.u32 920167782, %v1277
        %v1290 = vor.u32 %v1288, %v1289
        %v1291 = vshll.u32 920167782, %v1276
        %v1292 = vshrl.u32 1326507024, %v1277
        %v1293 = vor.u32 %v1291, %v1292
        %vm1294 = vcmp.lt.s32.totalorder %v1275, 1
        %vm1295 = vcmp.lt.s32.totalorder %v1275, 2
        %vm1296 = vcmp.lt.s32.totalorder %v1275, 3
        %vm1297 = vcmp.lt.s32.totalorder %v1275, 4
        %v1298 = vsel %vm1294, %v1278, %v1281
        %v1299 = vsel %vm1297, %v1287, 2102212464
        %v1300 = vsel %vm1296, %v1284, %v1299
        %v1301 = vsel %vm1295, %v1298, %v1300
        %v1302 = vsel %vm1294, %v1281, %v1284
        %v1303 = vsel %vm1297, %v1290, 920167782
        %v1304 = vsel %vm1296, %v1287, %v1303
        %v1305 = vsel %vm1295, %v1302, %v1304
        %v1306 = vsel %vm1294, %v1284, %v1287
        %v1307 = vsel %vm1297, %v1293, 1326507024
        %v1308 = vsel %vm1296, %v1290, %v1307
        %v1309 = vsel %vm1295, %v1306, %v1308
        %v1310 = vshll.u32 %v1270, 8
        %v1311 = vand.u32 %v1310, 65535
        %v1312 = vshrl.u32 %v1310, 16
        %v1313 = vand.u32 %v1309, 65535
        %v1314 = vshrl.u32 %v1309, 16
        %v1315 = vmul.u32 %v1311, %v1313
        %v1316 = vmul.u32 %v1311, %v1314
        %v1317 = vmul.u32 %v1312, %v1313
        %v1318 = vmul.u32 %v1312, %v1314
        %v1319 = vshll.u32 %v1316, 16
        %v1320 = vshrl.u32 %v1316, 16
        %v1321 = vshll.u32 %v1317, 16
        %v1322 = vshrl.u32 %v1317, 16
        %vm1323 = vc.u32 %v1315, %v1319
        %v1324 = vsel %vm1323, 1, 0
        %v1325 = vadd.s32 %v1315, %v1319
        %v1326 = vadd.s32 %v1318, %v1324
        %vm1327 = vc.u32 %v1325, %v1321
        %v1328 = vsel %vm1327, 1, 0
        %v1329 = vadd.s32 %v1325, %v1321
        %v1330 = vadd.s32 %v1326, %v1328
        %v1331 = vadd.s32 %v1330, %v1320
        %v1332 = vadd.s32 %v1331, %v1322
        %v1333 = vand.u32 %v1310, 65535
        %v1334 = vshrl.u32 %v1310, 16
        %v1335 = vand.u32 %v1305, 65535
        %v1336 = vshrl.u32 %v1305, 16
        %v1337 = vmul.u32 %v1333, %v1335
        %v1338 = vmul.u32 %v1333, %v1336
        %v1339 = vmul.u32 %v1334, %v1335
        %v1340 = vmul.u32 %v1334, %v1336
        %v1341 = vshll.u32 %v1338, 16
        %v1342 = vshrl.u32 %v1338, 16
        %v1343 = vshll.u32 %v1339, 16
        %v1344 = vshrl.u32 %v1339, 16
        %vm1345 = vc.u32 %v1337, %v1341
        %v1346 = vsel %vm1345, 1, 0
        %v1347 = vadd.s32 %v1337, %v1341
        %v1348 = vadd.s32 %v1340, %v1346
        %vm1349 = vc.u32 %v1347, %v1343
        %v1350 = vsel %vm1349, 1, 0
        %v1351 = vadd.s32 %v1347, %v1343
        %v1352 = vadd.s32 %v1348, %v1350
        %v1353 = vadd.s32 %v1352, %v1342
        %v1354 = vadd.s32 %v1353, %v1344
        %v1355 = vmul.u32 %v1310, %v1301
        %v1356 = vadd.s32 %v1332, %v1351
        %vm1357 = vc.u32 %v1332, %v1351
        %v1358 = vadd.s32 %v1354, 1
        %v1359 = vsel %vm1357, %v1358, %v1354
        %v1360 = vadd.s32 %v1355, %v1359
        %v1361 = vadd.s32 %v1360, 536870912
        %v1362 = vshrl.u32 %v1361, 30
        %v1363 = vshll.u32 %v1362, 30
        %v1364 = vsub.s32 %v1360, %v1363
        %vm1365 = vcmp.lt.s32.totalorder %v1364, 0
        %v1366 = vsub.s32 0, %v1364
        %v1367 = vsel %vm1365, %v1366, %v1364
        %v1368 = vclz %v1367
        %v1369 = vsub.s32 %v1368, 2
        %vm1370 = vcmp.gt.s32.totalorder 0, %v1369
        %v1371 = vsel %vm1370, 0, %v1369
        %v1372 = vsub.s32 32, %v1371
        %v1373 = vshll.u32 %v1364, %v1371
        %v1374 = vshrl.u32 %v1356, %v1372
        %v1375 = vor.u32 %v1373, %v1374
        %v1376 = vsub.s32 4294967266, %v1371
        %v1377 = vadd.s32 %v1376, 127
        %v1378 = vshll.u32 %v1377, 23
        %v1379 = vor.u32 4788187, %v1378
        %v1380 = vand.u32 2147483647, %v1379
        %v1382 = vcvt.s32.f32 %v1375
        %v1383 = vmul.f32 %v1382, %v1380
        %v1384 = vxor.u32 %v1383, 2147483648
        %v1385 = vsel %vm1264, %v1384, %v1383
        %v1386 = vsub.s32 4, %v1362
        %v1387 = vsel %vm1264, %v1386, %v1362
        %v1388 = vsel %vm1263, %v798, %v1385
        %v1389 = vsel %vm1263, 0, %v1387
        %v1390 = vmul.f32 %v1388, %v1388
        %v1391 = vmul.f32 %v1390, -0.001358992
        %v1392 = vadd.f32 %v1391, 0.041655596
        %v1393 = vmul.f32 %v1390, %v1392
        %v1394 = vadd.f32 %v1393, -0.4999988
        %v1395 = vmul.f32 %v1390, %v1394
        %v1396 = vadd.f32 1.0, %v1395
        %v1397 = vmul.f32 %v1388, %v1388
        %v1398 = vmul.f32 %v1397, -0.00019511016
        %v1399 = vadd.f32 %v1398, 0.008332121
        %v1400 = vmul.f32 %v1397, %v1399
        %v1401 = vadd.f32 %v1400, -0.16666654
        %v1402 = vmul.f32 %v1397, %v1401
        %v1403 = vadd.f32 %v1402, 1.0
        %v1404 = vmul.f32 %v1403, %v1388
        %vm1405 = vweird.f32 %v798
        %v1406 = vadd.s32 %v1389, 3
        %v1407 = vand.u32 %v1406, 3
        %vm1408 = vcmp.lt.s32.totalorder %v1407, 2
        %vm1409 = vcmp.eq.s32.totalorder %v1407, 0
        %v1410 = vxor.u32 %v1404, 2147483648
        %v1411 = vsel %vm1409, %v1396, %v1410
        %vm1412 = vcmp.eq.s32.totalorder %v1407, 2
        %v1413 = vxor.u32 %v1396, 2147483648
        %v1414 = vsel %vm1412, %v1413, %v1404
        %v1415 = vsel %vm1408, %v1411, %v1414
        %v1416 = vsel %vm1405, nan, %v1415
        %v1417 = vmul.f32 %v768, 0.0438
        %v1418 = vmul.f32 %v769, 0.0438
        %v1419 = vmul.f32 %v952, %v777
        %v1420 = vmul.f32 %v1106, %v780
        %v1421 = vmul.f32 %v1261, %v787
        %v1422 = vmul.f32 %v1416, %v790
        %v1423 = vsub.f32 %v1419, %v1421
        %v1424 = vsub.f32 %v1420, %v1422
        %v1425 = vmul.f32 %v1417, %v1423
        %v1426 = vmul.f32 %v1418, %v1424
        %v1427 = vmul.f32 %v1261, %v777
        %v1428 = vmul.f32 %v1416, %v780
        %v1429 = vmul.f32 %v952, %v787
        %v1430 = vmul.f32 %v1106, %v790
        %v1431 = vadd.f32 %v1427, %v1429
        %v1432 = vadd.f32 %v1428, %v1430
        %v1433 = vmul.f32 %v1417, %v1431
        %v1434 = vmul.f32 %v1418, %v1432
        %1436 = vset.pattern.permute.xlu0 80
        %1437 = vperm.xlu0 %1436, %v1425
        %v1438 = vpop.permute.xlu0 %1437
        %1441 = vset.pattern.permute.xlu0 80
        %1442 = vperm.xlu0 %1441, %v1426
        %v1443 = vpop.permute.xlu0 %1442
        %v1445 = vmul.f32 %v1438, %v725
        %v1446 = vmul.f32 %v1443, %v728
        %1449 = vrot.lane.b32.xlu0 %v1445, 96
        %v1450 = vpop.permute.xlu0 %1449
        %1451 = vrot.lane.b32.xlu0 %v1446, 96
        %v1452 = vpop.permute.xlu0 %1451
        %vm1455 = vcmask 785408
        %v1456 = vsel %vm1455, 0.0, %v1450
        %v1457 = vsel %vm1455, 0.0, %v1452
        %vm1458 = vcmask 392192
        %v1459 = vsel %vm1458, %v1450, 0.0
        %v1460 = vsel %vm1458, %v1452, 0.0
        %v1461 = vadd.f32 %v1456, 0.0
        %v1462 = vadd.f32 %v1459, %v1457
        %v1463 = vadd.f32 %v1460, 0.0
        %v1467 = vrot.slane %v1461, 4
        %v1468 = vrot.slane %v1462, 4
        %v1469 = vrot.slane %v1463, 4
        %1470 = vrot.lane.b32.xlu0 %v1467, 64
        %v1471 = vpop.permute.xlu0 %1470
        %1472 = vrot.lane.b32.xlu0 %v1468, 64
        %v1473 = vpop.permute.xlu0 %1472
        %1474 = vrot.lane.b32.xlu0 %v1469, 64
        %v1475 = vpop.permute.xlu0 %1474
        %v1476 = vsel %vm657, %v1471, %v1473
        %v1477 = vsel %vm657, %v1473, %v1475
        %v1481 = vsel %vm657, 0.0, %v1471
        %v1482 = vadd.f32 %v1461, %v1481
        %v1483 = vadd.f32 %v1462, %v1476
        %v1484 = vadd.f32 %v1463, %v1477
        %v1488 = vrot.slane %v1482, 2
        %v1489 = vrot.slane %v1483, 2
        %v1490 = vrot.slane %v1484, 2
        %1491 = vrot.lane.b32.xlu0 %v1488, 32
        %v1492 = vpop.permute.xlu0 %1491
        %1493 = vrot.lane.b32.xlu0 %v1489, 32
        %v1494 = vpop.permute.xlu0 %1493
        %1495 = vrot.lane.b32.xlu0 %v1490, 32
        %v1496 = vpop.permute.xlu0 %1495
        %vm1497 = vcmask 261120
        %v1498 = vsel %vm1497, %v1492, %v1494
        %v1499 = vsel %vm1497, %v1494, %v1496
        %v1503 = vsel %vm1497, 0.0, %v1492
        %v1504 = vadd.f32 %v1482, %v1503
        %v1505 = vadd.f32 %v1483, %v1498
        %v1506 = vadd.f32 %v1484, %v1499
        %v1510 = vrot.slane %v1504, 1
        %v1511 = vrot.slane %v1505, 1
        %v1512 = vrot.slane %v1506, 1
        %1513 = vrot.lane.b32.xlu0 %v1510, 16
        %v1514 = vpop.permute.xlu0 %1513
        %1515 = vrot.lane.b32.xlu0 %v1511, 16
        %v1516 = vpop.permute.xlu0 %1515
        %1517 = vrot.lane.b32.xlu0 %v1512, 16
        %v1518 = vpop.permute.xlu0 %1517
        %vm1519 = vcmask 130048
        %v1520 = vsel %vm1519, %v1514, %v1516
        %v1521 = vsel %vm1519, %v1516, %v1518
        %v1524 = vadd.f32 %v1505, %v1520
        %v1525 = vadd.f32 %v1506, %v1521
        %1527 = vset.pattern.permute.xlu0 80
        %1528 = vperm.xlu0 %1527, %v1433
        %v1529 = vpop.permute.xlu0 %1528
        %1532 = vset.pattern.permute.xlu0 80
        %1533 = vperm.xlu0 %1532, %v1434
        %v1534 = vpop.permute.xlu0 %1533
        %v1536 = vmul.f32 %v1529, %v725
        %v1537 = vmul.f32 %v1534, %v728
        %1540 = vrot.lane.b32.xlu0 %v1536, 96
        %v1541 = vpop.permute.xlu0 %1540
        %1542 = vrot.lane.b32.xlu0 %v1537, 96
        %v1543 = vpop.permute.xlu0 %1542
        %v1546 = vsel %vm1455, 0.0, %v1541
        %v1547 = vsel %vm1455, 0.0, %v1543
        %v1548 = vsel %vm1458, %v1541, 0.0
        %v1549 = vsel %vm1458, %v1543, 0.0
        %v1550 = vadd.f32 %v1546, 0.0
        %v1551 = vadd.f32 %v1548, %v1547
        %v1552 = vadd.f32 %v1549, 0.0
        %v1556 = vrot.slane %v1550, 4
        %v1557 = vrot.slane %v1551, 4
        %v1558 = vrot.slane %v1552, 4
        %1559 = vrot.lane.b32.xlu0 %v1556, 64
        %v1560 = vpop.permute.xlu0 %1559
        %1561 = vrot.lane.b32.xlu0 %v1557, 64
        %v1562 = vpop.permute.xlu0 %1561
        %1563 = vrot.lane.b32.xlu0 %v1558, 64
        %v1564 = vpop.permute.xlu0 %1563
        %v1565 = vsel %vm657, %v1560, %v1562
        %v1566 = vsel %vm657, %v1562, %v1564
        %v1570 = vsel %vm657, 0.0, %v1560
        %v1571 = vadd.f32 %v1550, %v1570
        %v1572 = vadd.f32 %v1551, %v1565
        %v1573 = vadd.f32 %v1552, %v1566
        %v1577 = vrot.slane %v1571, 2
        %v1578 = vrot.slane %v1572, 2
        %v1579 = vrot.slane %v1573, 2
        %1580 = vrot.lane.b32.xlu0 %v1577, 32
        %v1581 = vpop.permute.xlu0 %1580
        %1582 = vrot.lane.b32.xlu0 %v1578, 32
        %v1583 = vpop.permute.xlu0 %1582
        %1584 = vrot.lane.b32.xlu0 %v1579, 32
        %v1585 = vpop.permute.xlu0 %1584
        %v1586 = vsel %vm1497, %v1581, %v1583
        %v1587 = vsel %vm1497, %v1583, %v1585
        %v1591 = vsel %vm1497, 0.0, %v1581
        %v1592 = vadd.f32 %v1571, %v1591
        %v1593 = vadd.f32 %v1572, %v1586
        %v1594 = vadd.f32 %v1573, %v1587
        %v1598 = vrot.slane %v1592, 1
        %v1599 = vrot.slane %v1593, 1
        %v1600 = vrot.slane %v1594, 1
        %1601 = vrot.lane.b32.xlu0 %v1598, 16
        %v1602 = vpop.permute.xlu0 %1601
        %1603 = vrot.lane.b32.xlu0 %v1599, 16
        %v1604 = vpop.permute.xlu0 %1603
        %1605 = vrot.lane.b32.xlu0 %v1600, 16
        %v1606 = vpop.permute.xlu0 %1605
        %v1607 = vsel %vm1519, %v1602, %v1604
        %v1608 = vsel %vm1519, %v1604, %v1606
        %v1611 = vadd.f32 %v1593, %v1607
        %v1612 = vadd.f32 %v1594, %v1608
        %v1615 = vrot.slane %v1611, 7
        %v1616 = vrot.slane %v1612, 7
        %vm1619 = vcmask 1040384
        %v1620 = vsel %vm1619, %v1524, %v1615
        %v1621 = vsel %vm1619, %v1525, %v1616
        %v1622 = vpack.c.bf16 %v1620, %v1620
        %v1623 = vpack.c.bf16 %v1621, %v1621
        %v1624 = vld [vmem:[%s492] sm:$0xff]
        %v1625 = vld [vmem:[%s492 + $0x8] sm:$0xff]
        %v1626 = vld [vmem:[%s492 + $0x10] sm:$0xff]
        %v1627 = vld [vmem:[%s492 + $0x18] sm:$0xff]
        %v1628 = vld [vmem:[%s492 + $0x20] sm:$0xff]
        %v1629 = vld [vmem:[%s492 + $0x28] sm:$0xff]
        %v1630 = vld [vmem:[%s492 + $0x30] sm:$0xff]
        %v1631 = vld [vmem:[%s492 + $0x38] sm:$0xff]
        %v1632 = vld [vmem:[%s492 + $0x40] sm:$0xff]
        %v1633 = vld [vmem:[%s492 + $0x48] sm:$0xff]
        %v1634 = vld [vmem:[%s492 + $0x50] sm:$0xff]
        %v1635 = vld [vmem:[%s492 + $0x58] sm:$0xff]
        %v1636 = vld [vmem:[%s492 + $0x60] sm:$0xff]
        %v1637 = vld [vmem:[%s492 + $0x68] sm:$0xff]
        %v1638 = vld [vmem:[%s492 + $0x70] sm:$0xff]
        %v1639 = vld [vmem:[%s492 + $0x78] sm:$0xff]
        %v1640 = vld [vmem:[%s492 + $0x80] sm:$0xff]
        %v1641 = vld [vmem:[%s492 + $0x88] sm:$0xff]
        %v1642 = vld [vmem:[%s492 + $0x90] sm:$0xff]
        %v1643 = vld [vmem:[%s492 + $0x98] sm:$0xff]
        %v1644 = vld [vmem:[%s492 + $0xa0] sm:$0xff]
        %v1645 = vld [vmem:[%s492 + $0xa8] sm:$0xff]
        %v1646 = vld [vmem:[%s492 + $0xb0] sm:$0xff]
        %v1647 = vld [vmem:[%s492 + $0xb8] sm:$0xff]
        %v1648 = vld [vmem:[%s492 + $0xc0] sm:$0xff]
        %v1649 = vld [vmem:[%s492 + $0xc8] sm:$0xff]
        %v1650 = vld [vmem:[%s492 + $0xd0] sm:$0xff]
        %v1651 = vld [vmem:[%s492 + $0xd8] sm:$0xff]
        %v1652 = vld [vmem:[%s492 + $0xe0] sm:$0xff]
        %v1653 = vld [vmem:[%s492 + $0xe8] sm:$0xff]
        %v1654 = vld [vmem:[%s492 + $0xf0] sm:$0xff]
        %v1655 = vld [vmem:[%s492 + $0xf8] sm:$0xff]
        %v1656 = vld [vmem:[%s492 + $0x100] sm:$0xff]
        %v1657 = vld [vmem:[%s492 + $0x108] sm:$0xff]
        %v1658 = vld [vmem:[%s492 + $0x110] sm:$0xff]
        %v1659 = vld [vmem:[%s492 + $0x118] sm:$0xff]
        %v1660 = vld [vmem:[%s492 + $0x120] sm:$0xff]
        %v1661 = vld [vmem:[%s492 + $0x128] sm:$0xff]
        %v1662 = vld [vmem:[%s492 + $0x130] sm:$0xff]
        %v1663 = vld [vmem:[%s492 + $0x138] sm:$0xff]
        %v1664 = vld [vmem:[%s492 + $0x140] sm:$0xff]
        %v1665 = vld [vmem:[%s492 + $0x148] sm:$0xff]
        %v1666 = vld [vmem:[%s492 + $0x150] sm:$0xff]
        %v1667 = vld [vmem:[%s492 + $0x158] sm:$0xff]
        %v1668 = vld [vmem:[%s492 + $0x160] sm:$0xff]
        %v1669 = vld [vmem:[%s492 + $0x168] sm:$0xff]
        %v1670 = vld [vmem:[%s492 + $0x170] sm:$0xff]
        %v1671 = vld [vmem:[%s492 + $0x178] sm:$0xff]
        %v1672 = vld [vmem:[%s492 + $0x180] sm:$0xff]
        %v1673 = vld [vmem:[%s492 + $0x188] sm:$0xff]
        %v1674 = vld [vmem:[%s492 + $0x190] sm:$0xff]
        %v1675 = vld [vmem:[%s492 + $0x198] sm:$0xff]
        %v1676 = vld [vmem:[%s492 + $0x1a0] sm:$0xff]
        %v1677 = vld [vmem:[%s492 + $0x1a8] sm:$0xff]
        %v1678 = vld [vmem:[%s492 + $0x1b0] sm:$0xff]
        %v1679 = vld [vmem:[%s492 + $0x1b8] sm:$0xff]
        %v1680 = vld [vmem:[%s492 + $0x1c0] sm:$0xff]
        %v1681 = vld [vmem:[%s492 + $0x1c8] sm:$0xff]
        %v1682 = vld [vmem:[%s492 + $0x1d0] sm:$0xff]
        %v1683 = vld [vmem:[%s492 + $0x1d8] sm:$0xff]
        %v1684 = vld [vmem:[%s492 + $0x1e0] sm:$0xff]
        %v1685 = vld [vmem:[%s492 + $0x1e8] sm:$0xff]
        %v1686 = vld [vmem:[%s492 + $0x1f0] sm:$0xff]
        %v1687 = vld [vmem:[%s492 + $0x1f8] sm:$0xff]
        %v1752 = vunpack.c.l.b16 %v1624
        %v1753 = vunpack.c.h.b16 %v1624
        %v1754 = vunpack.c.l.b16 %v1625
        %v1755 = vunpack.c.h.b16 %v1625
        %v1756 = vunpack.c.l.b16 %v1626
        %v1757 = vunpack.c.h.b16 %v1626
        %v1758 = vunpack.c.l.b16 %v1627
        %v1759 = vunpack.c.h.b16 %v1627
        %v1760 = vunpack.c.l.b16 %v1628
        %v1761 = vunpack.c.h.b16 %v1628
        %v1762 = vunpack.c.l.b16 %v1629
        %v1763 = vunpack.c.h.b16 %v1629
        %v1764 = vunpack.c.l.b16 %v1630
        %v1765 = vunpack.c.h.b16 %v1630
        %v1766 = vunpack.c.l.b16 %v1631
        %v1767 = vunpack.c.h.b16 %v1631
        %v1768 = vunpack.c.l.b16 %v1632
        %v1769 = vunpack.c.h.b16 %v1632
        %v1770 = vunpack.c.l.b16 %v1633
        %v1771 = vunpack.c.h.b16 %v1633
        %v1772 = vunpack.c.l.b16 %v1634
        %v1773 = vunpack.c.h.b16 %v1634
        %v1774 = vunpack.c.l.b16 %v1635
        %v1775 = vunpack.c.h.b16 %v1635
        %v1776 = vunpack.c.l.b16 %v1636
        %v1777 = vunpack.c.h.b16 %v1636
        %v1778 = vunpack.c.l.b16 %v1637
        %v1779 = vunpack.c.h.b16 %v1637
        %v1780 = vunpack.c.l.b16 %v1638
        %v1781 = vunpack.c.h.b16 %v1638
        %v1782 = vunpack.c.l.b16 %v1639
        %v1783 = vunpack.c.h.b16 %v1639
        %v1784 = vunpack.c.l.b16 %v1640
        %v1785 = vunpack.c.h.b16 %v1640
        %v1786 = vunpack.c.l.b16 %v1641
        %v1787 = vunpack.c.h.b16 %v1641
        %v1788 = vunpack.c.l.b16 %v1642
        %v1789 = vunpack.c.h.b16 %v1642
        %v1790 = vunpack.c.l.b16 %v1643
        %v1791 = vunpack.c.h.b16 %v1643
        %v1792 = vunpack.c.l.b16 %v1644
        %v1793 = vunpack.c.h.b16 %v1644
        %v1794 = vunpack.c.l.b16 %v1645
        %v1795 = vunpack.c.h.b16 %v1645
        %v1796 = vunpack.c.l.b16 %v1646
        %v1797 = vunpack.c.h.b16 %v1646
        %v1798 = vunpack.c.l.b16 %v1647
        %v1799 = vunpack.c.h.b16 %v1647
        %v1800 = vunpack.c.l.b16 %v1648
        %v1801 = vunpack.c.h.b16 %v1648
        %v1802 = vunpack.c.l.b16 %v1649
        %v1803 = vunpack.c.h.b16 %v1649
        %v1804 = vunpack.c.l.b16 %v1650
        %v1805 = vunpack.c.h.b16 %v1650
        %v1806 = vunpack.c.l.b16 %v1651
        %v1807 = vunpack.c.h.b16 %v1651
        %v1808 = vunpack.c.l.b16 %v1652
        %v1809 = vunpack.c.h.b16 %v1652
        %v1810 = vunpack.c.l.b16 %v1653
        %v1811 = vunpack.c.h.b16 %v1653
        %v1812 = vunpack.c.l.b16 %v1654
        %v1813 = vunpack.c.h.b16 %v1654
        %v1814 = vunpack.c.l.b16 %v1655
        %v1815 = vunpack.c.h.b16 %v1655
        %v1816 = vunpack.c.l.b16 %v1656
        %v1817 = vunpack.c.h.b16 %v1656
        %v1818 = vunpack.c.l.b16 %v1657
        %v1819 = vunpack.c.h.b16 %v1657
        %v1820 = vunpack.c.l.b16 %v1658
        %v1821 = vunpack.c.h.b16 %v1658
        %v1822 = vunpack.c.l.b16 %v1659
        %v1823 = vunpack.c.h.b16 %v1659
        %v1824 = vunpack.c.l.b16 %v1660
        %v1825 = vunpack.c.h.b16 %v1660
        %v1826 = vunpack.c.l.b16 %v1661
        %v1827 = vunpack.c.h.b16 %v1661
        %v1828 = vunpack.c.l.b16 %v1662
        %v1829 = vunpack.c.h.b16 %v1662
        %v1830 = vunpack.c.l.b16 %v1663
        %v1831 = vunpack.c.h.b16 %v1663
        %v1832 = vunpack.c.l.b16 %v1664
        %v1833 = vunpack.c.h.b16 %v1664
        %v1834 = vunpack.c.l.b16 %v1665
        %v1835 = vunpack.c.h.b16 %v1665
        %v1836 = vunpack.c.l.b16 %v1666
        %v1837 = vunpack.c.h.b16 %v1666
        %v1838 = vunpack.c.l.b16 %v1667
        %v1839 = vunpack.c.h.b16 %v1667
        %v1840 = vunpack.c.l.b16 %v1668
        %v1841 = vunpack.c.h.b16 %v1668
        %v1842 = vunpack.c.l.b16 %v1669
        %v1843 = vunpack.c.h.b16 %v1669
        %v1844 = vunpack.c.l.b16 %v1670
        %v1845 = vunpack.c.h.b16 %v1670
        %v1846 = vunpack.c.l.b16 %v1671
        %v1847 = vunpack.c.h.b16 %v1671
        %v1848 = vunpack.c.l.b16 %v1672
        %v1849 = vunpack.c.h.b16 %v1672
        %v1850 = vunpack.c.l.b16 %v1673
        %v1851 = vunpack.c.h.b16 %v1673
        %v1852 = vunpack.c.l.b16 %v1674
        %v1853 = vunpack.c.h.b16 %v1674
        %v1854 = vunpack.c.l.b16 %v1675
        %v1855 = vunpack.c.h.b16 %v1675
        %v1856 = vunpack.c.l.b16 %v1676
        %v1857 = vunpack.c.h.b16 %v1676
        %v1858 = vunpack.c.l.b16 %v1677
        %v1859 = vunpack.c.h.b16 %v1677
        %v1860 = vunpack.c.l.b16 %v1678
        %v1861 = vunpack.c.h.b16 %v1678
        %v1862 = vunpack.c.l.b16 %v1679
        %v1863 = vunpack.c.h.b16 %v1679
        %v1864 = vunpack.c.l.b16 %v1680
        %v1865 = vunpack.c.h.b16 %v1680
        %v1866 = vunpack.c.l.b16 %v1681
        %v1867 = vunpack.c.h.b16 %v1681
        %v1868 = vunpack.c.l.b16 %v1682
        %v1869 = vunpack.c.h.b16 %v1682
        %v1870 = vunpack.c.l.b16 %v1683
        %v1871 = vunpack.c.h.b16 %v1683
        %v1872 = vunpack.c.l.b16 %v1684
        %v1873 = vunpack.c.h.b16 %v1684
        %v1874 = vunpack.c.l.b16 %v1685
        %v1875 = vunpack.c.h.b16 %v1685
        %v1876 = vunpack.c.l.b16 %v1686
        %v1877 = vunpack.c.h.b16 %v1686
        %v1878 = vunpack.c.l.b16 %v1687
        %v1879 = vunpack.c.h.b16 %v1687
        %v1880 = vpack.c.b16 %v1756, %v1752
        %v1881 = vpack.c.b16 %v1757, %v1753
        %v1882 = vpack.c.b16 %v1758, %v1754
        %v1883 = vpack.c.b16 %v1759, %v1755
        %v1884 = vpack.c.b16 %v1764, %v1760
        %v1885 = vpack.c.b16 %v1765, %v1761
        %v1886 = vpack.c.b16 %v1766, %v1762
        %v1887 = vpack.c.b16 %v1767, %v1763
        %v1888 = vpack.c.b16 %v1772, %v1768
        %v1889 = vpack.c.b16 %v1773, %v1769
        %v1890 = vpack.c.b16 %v1774, %v1770
        %v1891 = vpack.c.b16 %v1775, %v1771
        %v1892 = vpack.c.b16 %v1780, %v1776
        %v1893 = vpack.c.b16 %v1781, %v1777
        %v1894 = vpack.c.b16 %v1782, %v1778
        %v1895 = vpack.c.b16 %v1783, %v1779
        %v1896 = vpack.c.b16 %v1788, %v1784
        %v1897 = vpack.c.b16 %v1789, %v1785
        %v1898 = vpack.c.b16 %v1790, %v1786
        %v1899 = vpack.c.b16 %v1791, %v1787
        %v1900 = vpack.c.b16 %v1796, %v1792
        %v1901 = vpack.c.b16 %v1797, %v1793
        %v1902 = vpack.c.b16 %v1798, %v1794
        %v1903 = vpack.c.b16 %v1799, %v1795
        %v1904 = vpack.c.b16 %v1804, %v1800
        %v1905 = vpack.c.b16 %v1805, %v1801
        %v1906 = vpack.c.b16 %v1806, %v1802
        %v1907 = vpack.c.b16 %v1807, %v1803
        %v1908 = vpack.c.b16 %v1812, %v1808
        %v1909 = vpack.c.b16 %v1813, %v1809
        %v1910 = vpack.c.b16 %v1814, %v1810
        %v1911 = vpack.c.b16 %v1815, %v1811
        %v1912 = vpack.c.b16 %v1820, %v1816
        %v1913 = vpack.c.b16 %v1821, %v1817
        %v1914 = vpack.c.b16 %v1822, %v1818
        %v1915 = vpack.c.b16 %v1823, %v1819
        %v1916 = vpack.c.b16 %v1828, %v1824
        %v1917 = vpack.c.b16 %v1829, %v1825
        %v1918 = vpack.c.b16 %v1830, %v1826
        %v1919 = vpack.c.b16 %v1831, %v1827
        %v1920 = vpack.c.b16 %v1836, %v1832
        %v1921 = vpack.c.b16 %v1837, %v1833
        %v1922 = vpack.c.b16 %v1838, %v1834
        %v1923 = vpack.c.b16 %v1839, %v1835
        %v1924 = vpack.c.b16 %v1844, %v1840
        %v1925 = vpack.c.b16 %v1845, %v1841
        %v1926 = vpack.c.b16 %v1846, %v1842
        %v1927 = vpack.c.b16 %v1847, %v1843
        %v1928 = vpack.c.b16 %v1852, %v1848
        %v1929 = vpack.c.b16 %v1853, %v1849
        %v1930 = vpack.c.b16 %v1854, %v1850
        %v1931 = vpack.c.b16 %v1855, %v1851
        %v1932 = vpack.c.b16 %v1860, %v1856
        %v1933 = vpack.c.b16 %v1861, %v1857
        %v1934 = vpack.c.b16 %v1862, %v1858
        %v1935 = vpack.c.b16 %v1863, %v1859
        %v1936 = vpack.c.b16 %v1868, %v1864
        %v1937 = vpack.c.b16 %v1869, %v1865
        %v1938 = vpack.c.b16 %v1870, %v1866
        %v1939 = vpack.c.b16 %v1871, %v1867
        %v1940 = vpack.c.b16 %v1876, %v1872
        %v1941 = vpack.c.b16 %v1877, %v1873
        %v1942 = vpack.c.b16 %v1878, %v1874
        %v1943 = vpack.c.b16 %v1879, %v1875
        %2008 = vmatpush.bf16.msra.mxu0 %v1908
        %2009 = vmatpush.bf16.msra.mxu0 %v1904
        %2010 = vmatpush.bf16.msra.mxu0 %v1900
        %2011 = vmatpush.bf16.msra.mxu0 %v1896
        %2012 = vmatpush.bf16.msra.mxu0 %v1892
        %2013 = vmatpush.bf16.msra.mxu0 %v1888
        %2014 = vmatpush.bf16.msra.mxu0 %v1884
        %2015 = vmatpush.bf16.msra.mxu0 %v1880
        %2016 = vmatmul.bf16.gmra.mxu0 %v1622
        %v2017 = vpop.f32.mrf.mxu0
        %v2018 = vadd.f32 0.0, %v2017
        %v2019 = vpop.f32.mrf.mxu0
        %2020 = vdwg.mxu0
        %2021 = vmatpush.bf16.msra.mxu0 %v1940
        %2022 = vmatpush.bf16.msra.mxu0 %v1936
        %2023 = vmatpush.bf16.msra.mxu0 %v1932
        %2024 = vmatpush.bf16.msra.mxu0 %v1928
        %2025 = vmatpush.bf16.msra.mxu0 %v1924
        %2026 = vmatpush.bf16.msra.mxu0 %v1920
        %2027 = vmatpush.bf16.msra.mxu0 %v1916
        %2028 = vmatpush.bf16.msra.mxu0 %v1912
        %2029 = vmatmul.bf16.gmra.mxu0 %v1623
        %v2030 = vpop.f32.mrf.mxu0
        %v2031 = vadd.f32 %v2018, %v2030
        %v2032 = vpop.f32.mrf.mxu0
        %2033 = vdwg.mxu0
        %2034 = vmatpush.bf16.msra.mxu0 %v1909
        %2035 = vmatpush.bf16.msra.mxu0 %v1905
        %2036 = vmatpush.bf16.msra.mxu0 %v1901
        %2037 = vmatpush.bf16.msra.mxu0 %v1897
        %2038 = vmatpush.bf16.msra.mxu0 %v1893
        %2039 = vmatpush.bf16.msra.mxu0 %v1889
        %2040 = vmatpush.bf16.msra.mxu0 %v1885
        %2041 = vmatpush.bf16.msra.mxu0 %v1881
        %2042 = vmatmul.bf16.gmra.mxu0 %v1622
        %v2043 = vpop.f32.mrf.mxu0
        %v2044 = vadd.f32 0.0, %v2043
        %v2045 = vpop.f32.mrf.mxu0
        %2046 = vdwg.mxu0
        %2047 = vmatpush.bf16.msra.mxu0 %v1941
        %2048 = vmatpush.bf16.msra.mxu0 %v1937
        %2049 = vmatpush.bf16.msra.mxu0 %v1933
        %2050 = vmatpush.bf16.msra.mxu0 %v1929
        %2051 = vmatpush.bf16.msra.mxu0 %v1925
        %2052 = vmatpush.bf16.msra.mxu0 %v1921
        %2053 = vmatpush.bf16.msra.mxu0 %v1917
        %2054 = vmatpush.bf16.msra.mxu0 %v1913
        %2055 = vmatmul.bf16.gmra.mxu0 %v1623
        %v2056 = vpop.f32.mrf.mxu0
        %v2057 = vadd.f32 %v2044, %v2056
        %v2058 = vpop.f32.mrf.mxu0
        %2059 = vdwg.mxu0
        %2060 = vmatpush.bf16.msra.mxu0 %v1910
        %2061 = vmatpush.bf16.msra.mxu0 %v1906
        %2062 = vmatpush.bf16.msra.mxu0 %v1902
        %2063 = vmatpush.bf16.msra.mxu0 %v1898
        %2064 = vmatpush.bf16.msra.mxu0 %v1894
        %2065 = vmatpush.bf16.msra.mxu0 %v1890
        %2066 = vmatpush.bf16.msra.mxu0 %v1886
        %2067 = vmatpush.bf16.msra.mxu0 %v1882
        %2068 = vmatmul.bf16.gmra.mxu0 %v1622
        %v2069 = vpop.f32.mrf.mxu0
        %v2070 = vadd.f32 0.0, %v2069
        %v2071 = vpop.f32.mrf.mxu0
        %2072 = vdwg.mxu0
        %2073 = vmatpush.bf16.msra.mxu0 %v1942
        %2074 = vmatpush.bf16.msra.mxu0 %v1938
        %2075 = vmatpush.bf16.msra.mxu0 %v1934
        %2076 = vmatpush.bf16.msra.mxu0 %v1930
        %2077 = vmatpush.bf16.msra.mxu0 %v1926
        %2078 = vmatpush.bf16.msra.mxu0 %v1922
        %2079 = vmatpush.bf16.msra.mxu0 %v1918
        %2080 = vmatpush.bf16.msra.mxu0 %v1914
        %2081 = vmatmul.bf16.gmra.mxu0 %v1623
        %v2082 = vpop.f32.mrf.mxu0
        %v2083 = vadd.f32 %v2070, %v2082
        %v2084 = vpop.f32.mrf.mxu0
        %2085 = vdwg.mxu0
        %2086 = vmatpush.bf16.msra.mxu0 %v1911
        %2087 = vmatpush.bf16.msra.mxu0 %v1907
        %2088 = vmatpush.bf16.msra.mxu0 %v1903
        %2089 = vmatpush.bf16.msra.mxu0 %v1899
        %2090 = vmatpush.bf16.msra.mxu0 %v1895
        %2091 = vmatpush.bf16.msra.mxu0 %v1891
        %2092 = vmatpush.bf16.msra.mxu0 %v1887
        %2093 = vmatpush.bf16.msra.mxu0 %v1883
        %2094 = vmatmul.bf16.gmra.mxu0 %v1622
        %v2095 = vpop.f32.mrf.mxu0
        %v2096 = vadd.f32 0.0, %v2095
        %v2097 = vpop.f32.mrf.mxu0
        %2098 = vdwg.mxu0
        %2099 = vmatpush.bf16.msra.mxu0 %v1943
        %2100 = vmatpush.bf16.msra.mxu0 %v1939
        %2101 = vmatpush.bf16.msra.mxu0 %v1935
        %2102 = vmatpush.bf16.msra.mxu0 %v1931
        %2103 = vmatpush.bf16.msra.mxu0 %v1927
        %2104 = vmatpush.bf16.msra.mxu0 %v1923
        %2105 = vmatpush.bf16.msra.mxu0 %v1919
        %2106 = vmatpush.bf16.msra.mxu0 %v1915
        %2107 = vmatmul.bf16.gmra.mxu0 %v1623
        %v2108 = vpop.f32.mrf.mxu0
        %v2109 = vadd.f32 %v2096, %v2108
        %v2110 = vpop.f32.mrf.mxu0
        %2111 = vdwg.mxu0
        %v2114 = vrot.slane %v2083, 1
        %v2115 = vrot.slane %v2109, 1
        %v2118 = vsub.f32 %v2031, %v2114
        %v2119 = vsub.f32 %v2057, %v2115
        %v2120 = vrot.slane %v2083, 7
        %v2121 = vrot.slane %v2109, 7
        %v2124 = vadd.f32 %v2031, %v2120
        %v2125 = vadd.f32 %v2057, %v2121
        %v2126 = vsel %vm1619, %v2118, %v2124
        %v2127 = vsel %vm1619, %v2119, %v2125
        %v2130 = vrot.slane %v2127, 6
        %vm2131 = vcmask 1041408
        %v2132 = vsel %vm2131, %v2126, %v2130
        %2134 = vst [vmem:[%s576] sm:$0xf] %v2132
        %p2135 = scmp.lt.s32.totalorder %s29, 1
        %s2136 = scalar_select %p2135, %s29, 1
        %s2137 = smul.addr %s2136, 2
        %s2138 = smul.addr %s2137, 2
        %s2139 = scalar_lea.vmem %s11, %s2138
        // Predicated region
        $region81: #{fwd.1} parent=63 // pred_check
          %p2140 = pneg %p318
        $region82: #{fwd.1} parent=63 // pred_check_branch
          %2142 = sbr.rel (%p2140) target = $region84
        $region83: #{fwd.1} parent=63 // pred_region
          _
        $region84: #{fwd.1} parent=63 // pred_fallthru
          _
      $region64: #{fwd.1} parent=5 // pred_fallthru
        _
      %p2143 = scmp.le.s32.totalorder 2, %s24
      // Predicated region
      $region85: #{fwd.1} parent=5 // pred_check
        %p2144 = pneg %p2143
      $region86: #{fwd.1} parent=5 // pred_check_branch
        %2146 = sbr.rel (%p2144) target = $region88
      $region87: #{fwd.1} parent=5 // pred_region
        %s2147 = ssub.s32 %s24, 2
        // Predicated region
        $region89: #{fwd.1} parent=87 // pred_check
          %p2148 = pneg %p324
        $region90: #{fwd.1} parent=87 // pred_check_branch
          %2150 = sbr.rel (%p2148) target = $region92
        $region91: #{fwd.1} parent=87 // pred_region
          %p2151 = scmp.lt.s32.totalorder %s30, 1
          %s2152 = scalar_select %p2151, %s30, 1
          %s2153 = smul.addr %s2152, 2
          %s2154 = smul.addr %s2153, 2
          %s2155 = scalar_lea.vmem %s11, %s2154
        $region92: #{fwd.1} parent=87 // pred_fallthru
          _
      $region88: #{fwd.1} parent=5 // pred_fallthru
        _
    $region6: #{fwd.1} parent=1 // loop_footer
      %s28 = sadd.s32 1, %s24
    $region7: #{fwd.1} parent=1 // loop_footer_branch
      %23 = sbr.rel target = $region3
    $region8: #{fwd.1} parent=1 // loop_exit
      _
    %2156 = vsyncpa [#allocation3], 1
    %s2157 = scalar_lea.sflag [#allocation3], 1
    %2158 = vsyncpa %s2157, 1
    %2159 = vsyncpa [#allocation5], 1
    %s2160 = scalar_lea.sflag [#allocation5], 1
    %2161 = vsyncpa %s2160, 1
    %2162 = vsyncpa [#allocation8], 1
    %s2163 = scalar_lea.sflag [#allocation8], 1
    %2164 = vsyncpa %s2163, 1

</llo_original>
